<compile_context>
chip_gen: v7x
topology: tpu7x:2x2x1
jax: 0.10.0
libtpu: 0.0.40
codegen_flags: <defaults>
</compile_context>

<pallas_src>
import functools

import jax
import jax.numpy as jnp
from jax import lax
from jax.experimental import pallas as pl
from jax.experimental.pallas import tpu as pltpu


_VMEM_LIMIT = 32 * 1024 * 1024      # comfortably inside scoped VMEM on v5e/v6e/v7x


# ---------------------------------------------------------------------------
# Fused kernel: backbone (im2col conv + bias + ReLU + per-image global average
# pool) -> prototype projection -> hypernet MLP -> generated head matmul.
# Single grid step; everything is resident in VMEM.
# ---------------------------------------------------------------------------

def _fused_kernel(task_ref, patches_ref, conv_w_ref, conv_b_ref, emb_ref,
                  wp_ref, bp_ref, w1a_ref, w1b_ref, b1_ref, w2_ref, b2_ref,
                  wo_ref, bo_ref, out_ref, *,
                  n_img, hw, n_support, num_classes, num_features):
    """task_ref   : (1,) int32 in SMEM (scalar prefetch) — task index
       patches_ref: (n_img*hw, 9*Cin) bf16 im2col slab (support then prototypes)
       conv_w_ref : (9*Cin, F) bf16, conv_b_ref: (1, F) f32
       emb_ref    : (num_tasks, emb) f32 task-embedding table
       wp/bp      : hyper_emb_prototype Linear (in, out layout)
       w1a/w1b/b1 : hypernet layer 1, weight split so concat([z, zp]) = two matmuls
       w2/b2      : hypernet layer 2
       wo/bo      : hypernet output layer; wo is (Hh, C*F) bf16
       out_ref    : (B, C) logits
    """
    # Backbone: one K=9*Cin MXU matmul over ALL images, bias + ReLU on the VPU.
    act = jnp.dot(patches_ref[...], conv_w_ref[...],
                  preferred_element_type=jnp.float32)              # (n_img*hw, F)
    act = jnp.maximum(act + conv_b_ref[...], 0.0)

    # Per-image global average pool (sublane-group reduction).
    feats = jnp.mean(act.reshape(n_img, hw, num_features), axis=1)  # (n_img, F)
    feat_sup = feats[:n_support, :]                                  # (B, F)
    feat_proto = feats[n_support:, :]                                # (P, F)

    # Task embedding lookup from the resident table (index lives in SMEM).
    z = emb_ref[pl.ds(task_ref[0], 1), :]                            # (1, emb)

    # z_prototypes = Linear(protofeat); mean over prototypes.
    zp = jnp.dot(feat_proto, wp_ref[...],
                 preferred_element_type=jnp.float32) + bp_ref[...]
    zp = jnp.mean(zp, axis=0, keepdims=True)                         # (1, proj)

    # Hypernet MLP hidden state; the concat([z, zp]) is folded into two matmuls.
    h = jnp.dot(z, w1a_ref[...], preferred_element_type=jnp.float32)
    h = h + jnp.dot(zp, w1b_ref[...], preferred_element_type=jnp.float32)
    h = jnp.maximum(h + b1_ref[...], 0.0)                            # (1, Hh)
    h = jnp.dot(h, w2_ref[...], preferred_element_type=jnp.float32) + b2_ref[...]
    h = jnp.maximum(h, 0.0)                                          # (1, Hh)

    # Generated BatchLinear weight (bf16 wo stream, f32 accumulation) + head.
    w_flat = jnp.dot(h.astype(jnp.bfloat16), wo_ref[...],
                     preferred_element_type=jnp.float32) + bo_ref[...]   # (1, C*F)
    w_head = w_flat.reshape(num_classes, num_features)                   # (C, F)
    out_ref[...] = lax.dot_general(
        feat_sup, w_head,
        dimension_numbers=(((1,), (1,)), ((), ())),
        preferred_element_type=jnp.float32)                              # (B, C)


def _run_fused(prep, patches, task_vec, n_support, n_proto, hw):
    F = prep["conv_b"].shape[1]
    emb = prep["hyper_emb"].shape[1]
    proj = prep["wp"].shape[1]
    Hh = prep["w2"].shape[0]
    CF = prep["wo"].shape[1]
    C = CF // F
    n_img = n_support + n_proto
    n_pix, K = patches.shape
    assert n_pix == n_img * hw

    kernel = functools.partial(
        _fused_kernel, n_img=n_img, hw=hw, n_support=n_support,
        num_classes=C, num_features=F)

    flops = 2 * (n_pix * K * F + n_proto * F * proj + emb * Hh + proj * Hh
                 + Hh * Hh + Hh * CF + n_support * F * C)
    bytes_accessed = (patches.size * patches.dtype.itemsize
                      + sum(int(v.size) * v.dtype.itemsize for v in prep.values())
                      + 4 * n_support * C)

    def full(shape):
        return pl.BlockSpec(shape, lambda i, t, _s=shape: (0,) * len(_s))

    return pl.pallas_call(
        kernel,
        out_shape=jax.ShapeDtypeStruct((n_support, C), jnp.float32),
        grid_spec=pltpu.PrefetchScalarGridSpec(
            num_scalar_prefetch=1,            # task index -> SMEM
            grid=(1,),
            in_specs=[
                full(patches.shape),          # im2col slab (bf16)
                full(prep["conv_w"].shape),   # (9*Cin, F) bf16
                full(prep["conv_b"].shape),   # (1, F)
                full(prep["hyper_emb"].shape),
                full(prep["wp"].shape),
                full(prep["bp"].shape),
                full(prep["w1a"].shape),
                full(prep["w1b"].shape),
                full(prep["b1"].shape),
                full(prep["w2"].shape),
                full(prep["b2"].shape),
                full(prep["wo"].shape),       # (Hh, C*F) bf16
                full(prep["bo"].shape),
            ],
            out_specs=pl.BlockSpec((n_support, C), lambda i, t: (0, 0)),
        ),
        compiler_params=pltpu.CompilerParams(
            dimension_semantics=("arbitrary",),
            vmem_limit_bytes=_VMEM_LIMIT),
        cost_estimate=pl.CostEstimate(flops=flops, transcendentals=0,
                                      bytes_accessed=bytes_accessed),
    )(task_vec, patches,
      prep["conv_w"], prep["conv_b"], prep["hyper_emb"],
      prep["wp"], prep["bp"], prep["w1a"], prep["w1b"], prep["b1"],
      prep["w2"], prep["b2"], prep["wo"], prep["bo"])


# ---------------------------------------------------------------------------
# Parameter packing (ONCE, outside the forward path) + forward wrapper.
# ---------------------------------------------------------------------------

def prepare_params(params):
    """Pack PyTorch-layout params into kernel-ready (in, out) layouts."""
    emb = params["hyper_emb"].shape[1]
    cout, cin = params["conv_w"].shape[:2]
    return {
        # conv (Cout, Cin, 3, 3) -> im2col (kh,kw,cin)-major x Cout, bf16 MXU operand
        "conv_w": jnp.transpose(params["conv_w"], (2, 3, 1, 0))
                      .reshape(9 * cin, cout).astype(jnp.bfloat16),
        "conv_b": params["conv_b"].reshape(1, cout),
        "hyper_emb": params["hyper_emb"],
        "wp": params["proto_w"].T,                       # (F, proj)
        "bp": params["proto_b"][None, :],                # (1, proj)
        "w1a": params["h1_w"][:, :emb].T,                # (emb, H)
        "w1b": params["h1_w"][:, emb:].T,                # (proj, H)
        "b1": params["h1_b"][None, :],                   # (1, H)
        "w2": params["h2_w"].T,                          # (H, H)
        "b2": params["h2_b"][None, :],                   # (1, H)
        "wo": params["out_w"].T.astype(jnp.bfloat16),    # (H, C*F) bf16 stream
        "bo": params["out_b"][None, :],                  # (1, C*F)
    }


def _im2col_3x3_same(x_nchw):
    """(N, Cin, H, W) f32 -> (N*H*W, 9*Cin) im2col slab, tap-major / cin-minor."""
    N, Cin, H, W = x_nchw.shape
    x_nhwc = jnp.transpose(x_nchw, (0, 2, 3, 1))
    xp = jnp.pad(x_nhwc, ((0, 0), (1, 1), (1, 1), (0, 0)))      # 'same' padding
    cols = [xp[:, kh:kh + H, kw:kw + W, :] for kh in range(3) for kw in range(3)]
    return jnp.concatenate(cols, axis=-1).reshape(N * H * W, 9 * Cin)


@jax.jit
def hypercmtl_forward(prep, support_set, prototypes, task_idx):
    """Forward pass of HyperCMTL_seq_prototype_simple. Image inputs are NCHW f32."""
    B = support_set.shape[0]
    P = prototypes.shape[0]
    H, W = support_set.shape[2], support_set.shape[3]
    # One im2col slab over support + prototype images (identical backbone weights);
    # fuses into a single XLA fusion under jit, feeds ONE fused pallas_call.
    x_all = jnp.concatenate([support_set, prototypes], axis=0)
    patches = _im2col_3x3_same(x_all).astype(jnp.bfloat16)
    task_vec = jnp.asarray(task_idx, jnp.int32).reshape(1)
    return _run_fused(prep, patches, task_vec, B, P, H * W)        # (B, C)


# ---------------------------------------------------------------------------
# Pure-JAX reference (same math) for a numerical sanity check.
# ---------------------------------------------------------------------------

def reference_forward(params, support_set, prototypes, task_idx):
    def backbone(x):
        y = lax.conv_general_dilated(
            x, params["conv_w"], window_strides=(1, 1), padding="SAME",
            dimension_numbers=("NCHW", "OIHW", "NCHW"))
        y = jnp.maximum(y + params["conv_b"][None, :, None, None], 0.0)
        return y.mean(axis=(2, 3))
    feat = backbone(support_set)
    proto_feat = backbone(prototypes)
    z = params["hyper_emb"][task_idx][None, :]
    zp = proto_feat @ params["proto_w"].T + params["proto_b"]
    zp = zp.mean(axis=0, keepdims=True)
    h = jnp.concatenate([z, zp], axis=1)
    h = jnp.maximum(h @ params["h1_w"].T + params["h1_b"], 0.0)
    h = jnp.maximum(h @ params["h2_w"].T + params["h2_b"], 0.0)
    w_flat = h @ params["out_w"].T + params["out_b"]
    w_head = w_flat.reshape(-1, feat.shape[1])
    return feat @ w_head.T


# ---------------------------------------------------------------------------
# Deterministic parameter construction + demo run
# ---------------------------------------------------------------------------

def make_params(key, *, num_tasks, num_classes, cin, num_features,
                emb_size, proj, hidden,
                mean_init_emb=0.0, std_init_emb=0.01):
    ks = jax.random.split(key, 10)
    hn_in = emb_size + proj
    return {
        # backbone stand-in: 3x3 conv (Cout=num_features, Cin=cin) + bias
        "conv_w": 0.05 * jax.random.normal(ks[0], (num_features, cin, 3, 3), jnp.float32),
        "conv_b": 0.05 * jax.random.normal(ks[1], (num_features,), jnp.float32),
        # nn.Embedding(num_tasks, emb_size), normal(mean, std)
        "hyper_emb": mean_init_emb + std_init_emb *
                     jax.random.normal(ks[2], (num_tasks, emb_size), jnp.float32),
        # hyper_emb_prototype = Linear(num_features, proj); weight normal(mean, std)
        "proto_w": mean_init_emb + std_init_emb *
                   jax.random.normal(ks[3], (proj, num_features), jnp.float32),
        "proto_b": 0.05 * jax.random.normal(ks[4], (proj,), jnp.float32),
        # hypernetwork MLP: hn_in -> hidden -> hidden -> num_classes*num_features
        "h1_w": 0.05 * jax.random.normal(ks[5], (hidden, hn_in), jnp.float32),
        "h1_b": jnp.zeros((hidden,), jnp.float32),
        "h2_w": 0.05 * jax.random.normal(ks[6], (hidden, hidden), jnp.float32),
        "h2_b": jnp.zeros((hidden,), jnp.float32),
        "out_w": 0.05 * jax.random.normal(ks[7], (num_classes * num_features, hidden),
                                          jnp.float32),
        "out_b": jnp.zeros((num_classes * num_features,), jnp.float32),
    }


if __name__ == "__main__":
    key = jax.random.PRNGKey(0)
    k_par, k_sup, k_proto = jax.random.split(key, 3)

    # Small shapes implied by the forward pass.
    B, P = 2, 4                 # support batch, number of prototype images
    CIN, H, W = 3, 16, 16       # NCHW image inputs
    NUM_FEATURES = 128          # backbone.num_features (lane-dense)
    NUM_CLASSES = 5             # num_classes_per_task
    EMB_SIZE = 8                # model_config['emb_size']
    PROJ = 16                   # model_config['projection_prototypes']
    HIDDEN = 32                 # hyper_hidden_features
    NUM_TASKS = 3
    TASK_IDX = 1

    params = make_params(
        k_par, num_tasks=NUM_TASKS, num_classes=NUM_CLASSES, cin=CIN,
        num_features=NUM_FEATURES, emb_size=EMB_SIZE, proj=PROJ, hidden=HIDDEN)
    prep = prepare_params(params)   # one-time weight packing (hoisted out of forward)

    support_set = jax.random.normal(k_sup, (B, CIN, H, W), jnp.float32)
    prototypes = jax.random.normal(k_proto, (P, CIN, H, W), jnp.float32)

    out = hypercmtl_forward(prep, support_set, prototypes, TASK_IDX)
    out = jax.block_until_ready(out)

    assert out.shape == (B, NUM_CLASSES), out.shape
    assert bool(jnp.all(jnp.isfinite(out)))

    # Numerical sanity check against a pure-JAX reference of the same math.
    # bf16 MXU operands (f32 accumulation) -> compare with a scale-aware tolerance.
    ref = reference_forward(params, support_set, prototypes, TASK_IDX)
    err = float(jnp.max(jnp.abs(out - ref)))
    scale = float(jnp.max(jnp.abs(ref))) + 1e-8
    assert err <= 5e-2 * scale, (err, scale, out, ref)

    print("KERNEL_OK")
</pallas_src>

<mosaic_0001>
module attributes {stable_mosaic.version = 11 : i64} {
  func.func @_fused_kernel(%arg0: i32, %arg1: memref<1xi32, #tpu.memory_space<smem>>, %arg2: memref<1536x27xbf16, #tpu.memory_space<vmem>>, %arg3: memref<27x128xbf16, #tpu.memory_space<vmem>>, %arg4: memref<1x128xf32, #tpu.memory_space<vmem>>, %arg5: memref<3x8xf32, #tpu.memory_space<vmem>>, %arg6: memref<128x16xf32, #tpu.memory_space<vmem>>, %arg7: memref<1x16xf32, #tpu.memory_space<vmem>>, %arg8: memref<8x32xf32, #tpu.memory_space<vmem>>, %arg9: memref<16x32xf32, #tpu.memory_space<vmem>>, %arg10: memref<1x32xf32, #tpu.memory_space<vmem>>, %arg11: memref<32x32xf32, #tpu.memory_space<vmem>>, %arg12: memref<1x32xf32, #tpu.memory_space<vmem>>, %arg13: memref<32x640xbf16, #tpu.memory_space<vmem>>, %arg14: memref<1x640xf32, #tpu.memory_space<vmem>>, %arg15: memref<2x5xf32, #tpu.memory_space<vmem>>) attributes {dimension_semantics = [#tpu.dimension_semantics<arbitrary>], iteration_bounds = array<i64: 1>, scalar_prefetch = 1 : i64, scratch_operands = 0 : i64, tpu.core_type = #tpu.core_type<tc>, window_params = [{pipeline_mode = #tpu.pipeline_mode<synchronous>, transform_indices = @transform_0, window_bounds = array<i64: 1536, 27>}, {pipeline_mode = #tpu.pipeline_mode<synchronous>, transform_indices = @transform_1, window_bounds = array<i64: 27, 128>}, {pipeline_mode = #tpu.pipeline_mode<synchronous>, transform_indices = @transform_2, window_bounds = array<i64: 1, 128>}, {pipeline_mode = #tpu.pipeline_mode<synchronous>, transform_indices = @transform_3, window_bounds = array<i64: 3, 8>}, {pipeline_mode = #tpu.pipeline_mode<synchronous>, transform_indices = @transform_4, window_bounds = array<i64: 128, 16>}, {pipeline_mode = #tpu.pipeline_mode<synchronous>, transform_indices = @transform_5, window_bounds = array<i64: 1, 16>}, {pipeline_mode = #tpu.pipeline_mode<synchronous>, transform_indices = @transform_6, window_bounds = array<i64: 8, 32>}, {pipeline_mode = #tpu.pipeline_mode<synchronous>, transform_indices = @transform_7, window_bounds = array<i64: 16, 32>}, {pipeline_mode = #tpu.pipeline_mode<synchronous>, transform_indices = @transform_8, window_bounds = array<i64: 1, 32>}, {pipeline_mode = #tpu.pipeline_mode<synchronous>, transform_indices = @transform_9, window_bounds = array<i64: 32, 32>}, {pipeline_mode = #tpu.pipeline_mode<synchronous>, transform_indices = @transform_10, window_bounds = array<i64: 1, 32>}, {pipeline_mode = #tpu.pipeline_mode<synchronous>, transform_indices = @transform_11, window_bounds = array<i64: 32, 640>}, {pipeline_mode = #tpu.pipeline_mode<synchronous>, transform_indices = @transform_12, window_bounds = array<i64: 1, 640>}, {pipeline_mode = #tpu.pipeline_mode<synchronous>, transform_indices = @transform_13, window_bounds = array<i64: 2, 5>}]} {
    %c0 = arith.constant 0 : index
    %c0_0 = arith.constant 0 : index
    %0 = vector.load %arg2[%c0, %c0_0] : memref<1536x27xbf16, #tpu.memory_space<vmem>>, vector<1536x27xbf16>
    %c0_1 = arith.constant 0 : index
    %c0_2 = arith.constant 0 : index
    %1 = vector.load %arg3[%c0_1, %c0_2] : memref<27x128xbf16, #tpu.memory_space<vmem>>, vector<27x128xbf16>
    %cst = arith.constant dense<0.000000e+00> : vector<1536x128xf32>
    %2 = tpu.matmul %0, %1, %cst {dimension_numbers = #tpu.dot_dimension_numbers<[1], [0], [0], [1], [0, 0, 1, 1], [], []>} : vector<1536x27xbf16>, vector<27x128xbf16>, vector<1536x128xf32> -> vector<1536x128xf32>
    %c0_3 = arith.constant 0 : index
    %c0_4 = arith.constant 0 : index
    %3 = vector.load %arg4[%c0_3, %c0_4] : memref<1x128xf32, #tpu.memory_space<vmem>>, vector<1x128xf32>
    %4 = vector.broadcast %3 : vector<1x128xf32> to vector<1536x128xf32>
    %5 = arith.addf %2, %4 : vector<1536x128xf32>
    %cst_5 = arith.constant 0.000000e+00 : f32
    %6 = vector.broadcast %cst_5 : f32 to vector<1536x128xf32>
    %7 = arith.maximumf %5, %6 : vector<1536x128xf32>
    %8 = vector.shape_cast %7 : vector<1536x128xf32> to vector<6x256x128xf32>
    %cst_6 = arith.constant dense<0.000000e+00> : vector<6x128xf32>
    %9 = vector.multi_reduction <add>, %8, %cst_6 [1] : vector<6x256x128xf32> to vector<6x128xf32>
    %cst_7 = arith.constant 2.560000e+02 : f32
    %10 = vector.broadcast %cst_7 : f32 to vector<6x128xf32>
    %11 = arith.divf %9, %10 : vector<6x128xf32>
    %12 = vector.extract_strided_slice %11 {offsets = [0, 0], sizes = [2, 128], strides = [1, 1]} : vector<6x128xf32> to vector<2x128xf32>
    %13 = vector.extract_strided_slice %11 {offsets = [2, 0], sizes = [4, 128], strides = [1, 1]} : vector<6x128xf32> to vector<4x128xf32>
    %c0_8 = arith.constant 0 : index
    %14 = memref.load %arg1[%c0_8] : memref<1xi32, #tpu.memory_space<smem>>
    %15 = arith.index_cast %14 : i32 to index
    %c0_9 = arith.constant 0 : index
    %16 = vector.load %arg5[%15, %c0_9] : memref<3x8xf32, #tpu.memory_space<vmem>>, vector<1x8xf32>
    %c0_10 = arith.constant 0 : index
    %c0_11 = arith.constant 0 : index
    %17 = vector.load %arg6[%c0_10, %c0_11] : memref<128x16xf32, #tpu.memory_space<vmem>>, vector<128x16xf32>
    %cst_12 = arith.constant dense<0.000000e+00> : vector<4x16xf32>
    %18 = tpu.matmul %13, %17, %cst_12 {dimension_numbers = #tpu.dot_dimension_numbers<[1], [0], [0], [1], [0, 0, 1, 1], [], []>} : vector<4x128xf32>, vector<128x16xf32>, vector<4x16xf32> -> vector<4x16xf32>
    %c0_13 = arith.constant 0 : index
    %c0_14 = arith.constant 0 : index
    %19 = vector.load %arg7[%c0_13, %c0_14] : memref<1x16xf32, #tpu.memory_space<vmem>>, vector<1x16xf32>
    %20 = vector.broadcast %19 : vector<1x16xf32> to vector<4x16xf32>
    %21 = arith.addf %18, %20 : vector<4x16xf32>
    %cst_15 = arith.constant dense<0.000000e+00> : vector<16xf32>
    %22 = vector.multi_reduction <add>, %21, %cst_15 [0] : vector<4x16xf32> to vector<16xf32>
    %23 = vector.shape_cast %22 : vector<16xf32> to vector<1x16xf32>
    %cst_16 = arith.constant 4.000000e+00 : f32
    %24 = vector.broadcast %cst_16 : f32 to vector<1x16xf32>
    %25 = arith.divf %23, %24 : vector<1x16xf32>
    %c0_17 = arith.constant 0 : index
    %c0_18 = arith.constant 0 : index
    %26 = vector.load %arg8[%c0_17, %c0_18] : memref<8x32xf32, #tpu.memory_space<vmem>>, vector<8x32xf32>
    %cst_19 = arith.constant dense<0.000000e+00> : vector<1x32xf32>
    %27 = tpu.matmul %16, %26, %cst_19 {dimension_numbers = #tpu.dot_dimension_numbers<[1], [0], [0], [1], [0, 0, 1, 1], [], []>} : vector<1x8xf32>, vector<8x32xf32>, vector<1x32xf32> -> vector<1x32xf32>
    %c0_20 = arith.constant 0 : index
    %c0_21 = arith.constant 0 : index
    %28 = vector.load %arg9[%c0_20, %c0_21] : memref<16x32xf32, #tpu.memory_space<vmem>>, vector<16x32xf32>
    %cst_22 = arith.constant dense<0.000000e+00> : vector<1x32xf32>
    %29 = tpu.matmul %25, %28, %cst_22 {dimension_numbers = #tpu.dot_dimension_numbers<[1], [0], [0], [1], [0, 0, 1, 1], [], []>} : vector<1x16xf32>, vector<16x32xf32>, vector<1x32xf32> -> vector<1x32xf32>
    %30 = arith.addf %27, %29 : vector<1x32xf32>
    %c0_23 = arith.constant 0 : index
    %c0_24 = arith.constant 0 : index
    %31 = vector.load %arg10[%c0_23, %c0_24] : memref<1x32xf32, #tpu.memory_space<vmem>>, vector<1x32xf32>
    %32 = arith.addf %30, %31 : vector<1x32xf32>
    %cst_25 = arith.constant 0.000000e+00 : f32
    %33 = vector.broadcast %cst_25 : f32 to vector<1x32xf32>
    %34 = arith.maximumf %32, %33 : vector<1x32xf32>
    %c0_26 = arith.constant 0 : index
    %c0_27 = arith.constant 0 : index
    %35 = vector.load %arg11[%c0_26, %c0_27] : memref<32x32xf32, #tpu.memory_space<vmem>>, vector<32x32xf32>
    %cst_28 = arith.constant dense<0.000000e+00> : vector<1x32xf32>
    %36 = tpu.matmul %34, %35, %cst_28 {dimension_numbers = #tpu.dot_dimension_numbers<[1], [0], [0], [1], [0, 0, 1, 1], [], []>} : vector<1x32xf32>, vector<32x32xf32>, vector<1x32xf32> -> vector<1x32xf32>
    %c0_29 = arith.constant 0 : index
    %c0_30 = arith.constant 0 : index
    %37 = vector.load %arg12[%c0_29, %c0_30] : memref<1x32xf32, #tpu.memory_space<vmem>>, vector<1x32xf32>
    %38 = arith.addf %36, %37 : vector<1x32xf32>
    %cst_31 = arith.constant 0.000000e+00 : f32
    %39 = vector.broadcast %cst_31 : f32 to vector<1x32xf32>
    %40 = arith.maximumf %38, %39 : vector<1x32xf32>
    %41 = arith.truncf %40 : vector<1x32xf32> to vector<1x32xbf16>
    %c0_32 = arith.constant 0 : index
    %c0_33 = arith.constant 0 : index
    %42 = vector.load %arg13[%c0_32, %c0_33] : memref<32x640xbf16, #tpu.memory_space<vmem>>, vector<32x640xbf16>
    %cst_34 = arith.constant dense<0.000000e+00> : vector<1x640xf32>
    %43 = tpu.matmul %41, %42, %cst_34 {dimension_numbers = #tpu.dot_dimension_numbers<[1], [0], [0], [1], [0, 0, 1, 1], [], []>} : vector<1x32xbf16>, vector<32x640xbf16>, vector<1x640xf32> -> vector<1x640xf32>
    %c0_35 = arith.constant 0 : index
    %c0_36 = arith.constant 0 : index
    %44 = vector.load %arg14[%c0_35, %c0_36] : memref<1x640xf32, #tpu.memory_space<vmem>>, vector<1x640xf32>
    %45 = arith.addf %43, %44 : vector<1x640xf32>
    %46 = vector.shape_cast %45 : vector<1x640xf32> to vector<5x128xf32>
    %cst_37 = arith.constant dense<0.000000e+00> : vector<2x5xf32>
    %47 = tpu.matmul %12, %46, %cst_37 {dimension_numbers = #tpu.dot_dimension_numbers<[1], [1], [0], [0], [0, 0, 1, 0], [], []>} : vector<2x128xf32>, vector<5x128xf32>, vector<2x5xf32> -> vector<2x5xf32>
    %c0_38 = arith.constant 0 : index
    %c0_39 = arith.constant 0 : index
    %48 = vector.load %arg15[%c0_38, %c0_39] : memref<2x5xf32, #tpu.memory_space<vmem>>, vector<2x5xf32>
    tpu.vector_store %arg15[%c0_38, %c0_39], %47 {strides = array<i32>} : memref<2x5xf32, #tpu.memory_space<vmem>>, vector<2x5xf32>,
    return
  }
  func.func @transform_0(%arg0: i32, %arg1: memref<1xi32, #tpu.memory_space<smem>>) -> (i32, i32) {
    %c0_i32 = arith.constant 0 : i32
    %c0_i32_0 = arith.constant 0 : i32
    %c0_i32_1 = arith.constant 0 : i32
    return %c0_i32, %c0_i32_0 : i32, i32
  }
  func.func @transform_1(%arg0: i32, %arg1: memref<1xi32, #tpu.memory_space<smem>>) -> (i32, i32) {
    %c0_i32 = arith.constant 0 : i32
    %c0_i32_0 = arith.constant 0 : i32
    %c0_i32_1 = arith.constant 0 : i32
    return %c0_i32, %c0_i32_0 : i32, i32
  }
  func.func @transform_2(%arg0: i32, %arg1: memref<1xi32, #tpu.memory_space<smem>>) -> (i32, i32) {
    %c0_i32 = arith.constant 0 : i32
    %c0_i32_0 = arith.constant 0 : i32
    %c0_i32_1 = arith.constant 0 : i32
    return %c0_i32, %c0_i32_0 : i32, i32
  }
  func.func @transform_3(%arg0: i32, %arg1: memref<1xi32, #tpu.memory_space<smem>>) -> (i32, i32) {
    %c0_i32 = arith.constant 0 : i32
    %c0_i32_0 = arith.constant 0 : i32
    %c0_i32_1 = arith.constant 0 : i32
    return %c0_i32, %c0_i32_0 : i32, i32
  }
  func.func @transform_4(%arg0: i32, %arg1: memref<1xi32, #tpu.memory_space<smem>>) -> (i32, i32) {
    %c0_i32 = arith.constant 0 : i32
    %c0_i32_0 = arith.constant 0 : i32
    %c0_i32_1 = arith.constant 0 : i32
    return %c0_i32, %c0_i32_0 : i32, i32
  }
  func.func @transform_5(%arg0: i32, %arg1: memref<1xi32, #tpu.memory_space<smem>>) -> (i32, i32) {
    %c0_i32 = arith.constant 0 : i32
    %c0_i32_0 = arith.constant 0 : i32
    %c0_i32_1 = arith.constant 0 : i32
    return %c0_i32, %c0_i32_0 : i32, i32
  }
  func.func @transform_6(%arg0: i32, %arg1: memref<1xi32, #tpu.memory_space<smem>>) -> (i32, i32) {
    %c0_i32 = arith.constant 0 : i32
    %c0_i32_0 = arith.constant 0 : i32
    %c0_i32_1 = arith.constant 0 : i32
    return %c0_i32, %c0_i32_0 : i32, i32
  }
  func.func @transform_7(%arg0: i32, %arg1: memref<1xi32, #tpu.memory_space<smem>>) -> (i32, i32) {
    %c0_i32 = arith.constant 0 : i32
    %c0_i32_0 = arith.constant 0 : i32
    %c0_i32_1 = arith.constant 0 : i32
    return %c0_i32, %c0_i32_0 : i32, i32
  }
  func.func @transform_8(%arg0: i32, %arg1: memref<1xi32, #tpu.memory_space<smem>>) -> (i32, i32) {
    %c0_i32 = arith.constant 0 : i32
    %c0_i32_0 = arith.constant 0 : i32
    %c0_i32_1 = arith.constant 0 : i32
    return %c0_i32, %c0_i32_0 : i32, i32
  }
  func.func @transform_9(%arg0: i32, %arg1: memref<1xi32, #tpu.memory_space<smem>>) -> (i32, i32) {
    %c0_i32 = arith.constant 0 : i32
    %c0_i32_0 = arith.constant 0 : i32
    %c0_i32_1 = arith.constant 0 : i32
    return %c0_i32, %c0_i32_0 : i32, i32
  }
  func.func @transform_10(%arg0: i32, %arg1: memref<1xi32, #tpu.memory_space<smem>>) -> (i32, i32) {
    %c0_i32 = arith.constant 0 : i32
    %c0_i32_0 = arith.constant 0 : i32
    %c0_i32_1 = arith.constant 0 : i32
    return %c0_i32, %c0_i32_0 : i32, i32
  }
  func.func @transform_11(%arg0: i32, %arg1: memref<1xi32, #tpu.memory_space<smem>>) -> (i32, i32) {
    %c0_i32 = arith.constant 0 : i32
    %c0_i32_0 = arith.constant 0 : i32
    %c0_i32_1 = arith.constant 0 : i32
    return %c0_i32, %c0_i32_0 : i32, i32
  }
  func.func @transform_12(%arg0: i32, %arg1: memref<1xi32, #tpu.memory_space<smem>>) -> (i32, i32) {
    %c0_i32 = arith.constant 0 : i32
    %c0_i32_0 = arith.constant 0 : i32
    %c0_i32_1 = arith.constant 0 : i32
    return %c0_i32, %c0_i32_0 : i32, i32
  }
  func.func @transform_13(%arg0: i32, %arg1: memref<1xi32, #tpu.memory_space<smem>>) -> (i32, i32) {
    %c0_i32 = arith.constant 0 : i32
    %c0_i32_0 = arith.constant 0 : i32
    %c0_i32_1 = arith.constant 0 : i32
    return %c0_i32, %c0_i32_0 : i32, i32
  }
}

</mosaic_0001>

<llo_original>
// kernel: hypercmtl_forward.1
$region0: #{hypercmtl_forward.1}
  #allocation0 [shape = 'u32[]', space=smem, size = 0x4, offset = 0x4, fixed_abs, tag = 'smem constant byte address 0x4 - core index']
  #allocation1 [shape = 'u32[144,128]{1,0:T(1,128)}', space=vmem, size = 0x12000, scoped, tag = 'internal scratch']
  #allocation2 [shape = 's32[1]{0}', space=sflag, size = 0x4, scoped, tag = 'scoped memory for hypercmtl_forward.1']
  #allocation3 [shape = 's32[1]{0:T(128)S(6)}', space=smem, size = 0x200, scoped, tag = 'prefetched SMEM operand 0']
  %s0 = inlined_call_operand.<no memory space> [shape: s32[1], index: 0, kind: input, shape index: {}]
  %s1 = inlined_call_operand.vmem [shape: bf16[1536,27], index: 1, kind: input, shape index: {}]
  %s2 = inlined_call_operand.vmem [shape: bf16[27,128], index: 2, kind: input, shape index: {}]
  %s3 = inlined_call_operand.vmem [shape: f32[1,128], index: 3, kind: input, shape index: {}]
  %s4 = inlined_call_operand.vmem [shape: f32[3,8], index: 4, kind: input, shape index: {}]
  %s5 = inlined_call_operand.vmem [shape: f32[128,16], index: 5, kind: input, shape index: {}]
  %s6 = inlined_call_operand.vmem [shape: f32[1,16], index: 6, kind: input, shape index: {}]
  %s7 = inlined_call_operand.vmem [shape: f32[8,32], index: 7, kind: input, shape index: {}]
  %s8 = inlined_call_operand.vmem [shape: f32[16,32], index: 8, kind: input, shape index: {}]
  %s9 = inlined_call_operand.vmem [shape: f32[1,32], index: 9, kind: input, shape index: {}]
  %s10 = inlined_call_operand.vmem [shape: f32[32,32], index: 10, kind: input, shape index: {}]
  %s11 = inlined_call_operand.vmem [shape: f32[1,32], index: 11, kind: input, shape index: {}]
  %s12 = inlined_call_operand.vmem [shape: bf16[32,640], index: 12, kind: input, shape index: {}]
  %s13 = inlined_call_operand.vmem [shape: f32[1,640], index: 13, kind: input, shape index: {}]
  %s14 = inlined_call_operand.hbm [shape: f32[2,5], index: 14, kind: output, shape index: {}]
  %s15 = sld [smem:[#allocation0]]
  $region62: #{hypercmtl_forward.1} parent=0
    _
  %s17 = ssub.s32 1, %s15
  %s18 = scalar_select 0, %s17, %s15
  %19 = sst [smem:[#allocation3]] %s0
  $region1: #{hypercmtl_forward.1} parent=0
    #allocation4 [shape = 'u8[1024]{0}', space=vmem, size = 0x400, scoped, tag = 'output window, operand 0, single buffered']
    #allocation5 [shape = 's32[1]{0}', space=sflag, size = 0x4, scoped, tag = 'scoped memory for hypercmtl_forward.1']
    %20 = vsyncpa [#allocation5], 0
    // Predicated region
    $region2: #{hypercmtl_forward.1} parent=1 // pred_check
      _
    $region3: #{hypercmtl_forward.1} parent=1 // pred_check_branch
      %22 = sbr.rel (0) target = $region5
    $region4: #{hypercmtl_forward.1} parent=1 // pred_region
      _
    $region5: #{hypercmtl_forward.1} parent=1 // pred_fallthru
      _
    // Predicated region
    $region6: #{hypercmtl_forward.1} parent=1 // pred_check
      _
    $region7: #{hypercmtl_forward.1} parent=1 // pred_check_branch
      %24 = sbr.rel (0) target = $region9
    $region8: #{hypercmtl_forward.1} parent=1 // pred_region
      _
    $region9: #{hypercmtl_forward.1} parent=1 // pred_fallthru
      _
    // Predicated region
    $region10: #{hypercmtl_forward.1} parent=1 // pred_check
      _
    $region11: #{hypercmtl_forward.1} parent=1 // pred_check_branch
      %26 = sbr.rel (0) target = $region13
    $region12: #{hypercmtl_forward.1} parent=1 // pred_region
      _
    $region13: #{hypercmtl_forward.1} parent=1 // pred_fallthru
      _
    // Predicated region
    $region14: #{hypercmtl_forward.1} parent=1 // pred_check
      _
    $region15: #{hypercmtl_forward.1} parent=1 // pred_check_branch
      %28 = sbr.rel (0) target = $region17
    $region16: #{hypercmtl_forward.1} parent=1 // pred_region
      _
    $region17: #{hypercmtl_forward.1} parent=1 // pred_fallthru
      _
    // Predicated region
    $region18: #{hypercmtl_forward.1} parent=1 // pred_check
      _
    $region19: #{hypercmtl_forward.1} parent=1 // pred_check_branch
      %30 = sbr.rel (0) target = $region21
    $region20: #{hypercmtl_forward.1} parent=1 // pred_region
      _
    $region21: #{hypercmtl_forward.1} parent=1 // pred_fallthru
      _
    // Predicated region
    $region22: #{hypercmtl_forward.1} parent=1 // pred_check
      _
    $region23: #{hypercmtl_forward.1} parent=1 // pred_check_branch
      %32 = sbr.rel (0) target = $region25
    $region24: #{hypercmtl_forward.1} parent=1 // pred_region
      _
    $region25: #{hypercmtl_forward.1} parent=1 // pred_fallthru
      _
    // Predicated region
    $region26: #{hypercmtl_forward.1} parent=1 // pred_check
      _
    $region27: #{hypercmtl_forward.1} parent=1 // pred_check_branch
      %34 = sbr.rel (0) target = $region29
    $region28: #{hypercmtl_forward.1} parent=1 // pred_region
      _
    $region29: #{hypercmtl_forward.1} parent=1 // pred_fallthru
      _
    // Predicated region
    $region30: #{hypercmtl_forward.1} parent=1 // pred_check
      _
    $region31: #{hypercmtl_forward.1} parent=1 // pred_check_branch
      %36 = sbr.rel (0) target = $region33
    $region32: #{hypercmtl_forward.1} parent=1 // pred_region
      _
    $region33: #{hypercmtl_forward.1} parent=1 // pred_fallthru
      _
    // Predicated region
    $region34: #{hypercmtl_forward.1} parent=1 // pred_check
      _
    $region35: #{hypercmtl_forward.1} parent=1 // pred_check_branch
      %38 = sbr.rel (0) target = $region37
    $region36: #{hypercmtl_forward.1} parent=1 // pred_region
      _
    $region37: #{hypercmtl_forward.1} parent=1 // pred_fallthru
      _
    // Predicated region
    $region38: #{hypercmtl_forward.1} parent=1 // pred_check
      _
    $region39: #{hypercmtl_forward.1} parent=1 // pred_check_branch
      %40 = sbr.rel (0) target = $region41
    $region40: #{hypercmtl_forward.1} parent=1 // pred_region
      _
    $region41: #{hypercmtl_forward.1} parent=1 // pred_fallthru
      _
    // Predicated region
    $region42: #{hypercmtl_forward.1} parent=1 // pred_check
      _
    $region43: #{hypercmtl_forward.1} parent=1 // pred_check_branch
      %42 = sbr.rel (0) target = $region45
    $region44: #{hypercmtl_forward.1} parent=1 // pred_region
      _
    $region45: #{hypercmtl_forward.1} parent=1 // pred_fallthru
      _
    // Predicated region
    $region46: #{hypercmtl_forward.1} parent=1 // pred_check
      _
    $region47: #{hypercmtl_forward.1} parent=1 // pred_check_branch
      %44 = sbr.rel (0) target = $region49
    $region48: #{hypercmtl_forward.1} parent=1 // pred_region
      _
    $region49: #{hypercmtl_forward.1} parent=1 // pred_fallthru
      _
    // Predicated region
    $region50: #{hypercmtl_forward.1} parent=1 // pred_check
      _
    $region51: #{hypercmtl_forward.1} parent=1 // pred_check_branch
      %46 = sbr.rel (0) target = $region53
    $region52: #{hypercmtl_forward.1} parent=1 // pred_region
      _
    $region53: #{hypercmtl_forward.1} parent=1 // pred_fallthru
      _
    %v48 = vld [vmem:[%s1] sm:$0xf]
    %v49 = vld [vmem:[%s1 + $0x4] sm:$0xf]
    %v50 = vld [vmem:[%s1 + $0x8] sm:$0xf]
    %v51 = vld [vmem:[%s1 + $0xc] sm:$0xf]
    %v52 = vld [vmem:[%s1 + $0x10] sm:$0xf]
    %v53 = vld [vmem:[%s1 + $0x14] sm:$0xf]
    %v54 = vld [vmem:[%s1 + $0x18] sm:$0xf]
    %v55 = vld [vmem:[%s1 + $0x1c] sm:$0xf]
    %v56 = vld [vmem:[%s1 + $0x20] sm:$0xf]
    %v57 = vld [vmem:[%s1 + $0x24] sm:$0xf]
    %v58 = vld [vmem:[%s1 + $0x28] sm:$0xf]
    %v59 = vld [vmem:[%s1 + $0x2c] sm:$0xf]
    %v60 = vld [vmem:[%s1 + $0x30] sm:$0xf]
    %v61 = vld [vmem:[%s1 + $0x34] sm:$0xf]
    %v62 = vld [vmem:[%s1 + $0x38] sm:$0xf]
    %v63 = vld [vmem:[%s1 + $0x3c] sm:$0xf]
    %v64 = vld [vmem:[%s1 + $0x40] sm:$0xf]
    %v65 = vld [vmem:[%s1 + $0x44] sm:$0xf]
    %v66 = vld [vmem:[%s1 + $0x48] sm:$0xf]
    %v67 = vld [vmem:[%s1 + $0x4c] sm:$0xf]
    %v68 = vld [vmem:[%s1 + $0x50] sm:$0xf]
    %v69 = vld [vmem:[%s1 + $0x54] sm:$0xf]
    %v70 = vld [vmem:[%s1 + $0x58] sm:$0xf]
    %v71 = vld [vmem:[%s1 + $0x5c] sm:$0xf]
    %v72 = vld [vmem:[%s1 + $0x60] sm:$0xf]
    %v73 = vld [vmem:[%s1 + $0x64] sm:$0xf]
    %v74 = vld [vmem:[%s1 + $0x68] sm:$0xf]
    %v75 = vld [vmem:[%s1 + $0x6c] sm:$0xf]
    %v76 = vld [vmem:[%s1 + $0x70] sm:$0xf]
    %v77 = vld [vmem:[%s1 + $0x74] sm:$0xf]
    %v78 = vld [vmem:[%s1 + $0x78] sm:$0xf]
    %v79 = vld [vmem:[%s1 + $0x7c] sm:$0xf]
    %v80 = vld [vmem:[%s1 + $0x80] sm:$0xf]
    %v81 = vld [vmem:[%s1 + $0x84] sm:$0xf]
    %v82 = vld [vmem:[%s1 + $0x88] sm:$0xf]
    %v83 = vld [vmem:[%s1 + $0x8c] sm:$0xf]
    %v84 = vld [vmem:[%s1 + $0x90] sm:$0xf]
    %v85 = vld [vmem:[%s1 + $0x94] sm:$0xf]
    %v86 = vld [vmem:[%s1 + $0x98] sm:$0xf]
    %v87 = vld [vmem:[%s1 + $0x9c] sm:$0xf]
    %v88 = vld [vmem:[%s1 + $0xa0] sm:$0xf]
    %v89 = vld [vmem:[%s1 + $0xa4] sm:$0xf]
    %v90 = vld [vmem:[%s1 + $0xa8] sm:$0xf]
    %v91 = vld [vmem:[%s1 + $0xac] sm:$0xf]
    %v92 = vld [vmem:[%s1 + $0xb0] sm:$0xf]
    %v93 = vld [vmem:[%s1 + $0xb4] sm:$0xf]
    %v94 = vld [vmem:[%s1 + $0xb8] sm:$0xf]
    %v95 = vld [vmem:[%s1 + $0xbc] sm:$0xf]
    %v96 = vld [vmem:[%s1 + $0xc0] sm:$0xf]
    %v97 = vld [vmem:[%s1 + $0xc4] sm:$0xf]
    %v98 = vld [vmem:[%s1 + $0xc8] sm:$0xf]
    %v99 = vld [vmem:[%s1 + $0xcc] sm:$0xf]
    %v100 = vld [vmem:[%s1 + $0xd0] sm:$0xf]
    %v101 = vld [vmem:[%s1 + $0xd4] sm:$0xf]
    %v102 = vld [vmem:[%s1 + $0xd8] sm:$0xf]
    %v103 = vld [vmem:[%s1 + $0xdc] sm:$0xf]
    %v104 = vld [vmem:[%s1 + $0xe0] sm:$0xf]
    %v105 = vld [vmem:[%s1 + $0xe4] sm:$0xf]
    %v106 = vld [vmem:[%s1 + $0xe8] sm:$0xf]
    %v107 = vld [vmem:[%s1 + $0xec] sm:$0xf]
    %v108 = vld [vmem:[%s1 + $0xf0] sm:$0xf]
    %v109 = vld [vmem:[%s1 + $0xf4] sm:$0xf]
    %v110 = vld [vmem:[%s1 + $0xf8] sm:$0xf]
    %v111 = vld [vmem:[%s1 + $0xfc] sm:$0xf]
    %v112 = vld [vmem:[%s1 + $0x100] sm:$0xf]
    %v113 = vld [vmem:[%s1 + $0x104] sm:$0xf]
    %v114 = vld [vmem:[%s1 + $0x108] sm:$0xf]
    %v115 = vld [vmem:[%s1 + $0x10c] sm:$0xf]
    %v116 = vld [vmem:[%s1 + $0x110] sm:$0xf]
    %v117 = vld [vmem:[%s1 + $0x114] sm:$0xf]
    %v118 = vld [vmem:[%s1 + $0x118] sm:$0xf]
    %v119 = vld [vmem:[%s1 + $0x11c] sm:$0xf]
    %v120 = vld [vmem:[%s1 + $0x120] sm:$0xf]
    %v121 = vld [vmem:[%s1 + $0x124] sm:$0xf]
    %v122 = vld [vmem:[%s1 + $0x128] sm:$0xf]
    %v123 = vld [vmem:[%s1 + $0x12c] sm:$0xf]
    %v124 = vld [vmem:[%s1 + $0x130] sm:$0xf]
    %v125 = vld [vmem:[%s1 + $0x134] sm:$0xf]
    %v126 = vld [vmem:[%s1 + $0x138] sm:$0xf]
    %v127 = vld [vmem:[%s1 + $0x13c] sm:$0xf]
    %v128 = vld [vmem:[%s1 + $0x140] sm:$0xf]
    %v129 = vld [vmem:[%s1 + $0x144] sm:$0xf]
    %v130 = vld [vmem:[%s1 + $0x148] sm:$0xf]
    %v131 = vld [vmem:[%s1 + $0x14c] sm:$0xf]
    %v132 = vld [vmem:[%s1 + $0x150] sm:$0xf]
    %v133 = vld [vmem:[%s1 + $0x154] sm:$0xf]
    %v134 = vld [vmem:[%s1 + $0x158] sm:$0xf]
    %v135 = vld [vmem:[%s1 + $0x15c] sm:$0xf]
    %v136 = vld [vmem:[%s1 + $0x160] sm:$0xf]
    %v137 = vld [vmem:[%s1 + $0x164] sm:$0xf]
    %v138 = vld [vmem:[%s1 + $0x168] sm:$0xf]
    %v139 = vld [vmem:[%s1 + $0x16c] sm:$0xf]
    %v140 = vld [vmem:[%s1 + $0x170] sm:$0xf]
    %v141 = vld [vmem:[%s1 + $0x174] sm:$0xf]
    %v142 = vld [vmem:[%s1 + $0x178] sm:$0xf]
    %v143 = vld [vmem:[%s1 + $0x17c] sm:$0xf]
    %v144 = vld [vmem:[%s1 + $0x180] sm:$0xf]
    %v145 = vld [vmem:[%s1 + $0x184] sm:$0xf]
    %v146 = vld [vmem:[%s1 + $0x188] sm:$0xf]
    %v147 = vld [vmem:[%s1 + $0x18c] sm:$0xf]
    %v148 = vld [vmem:[%s1 + $0x190] sm:$0xf]
    %v149 = vld [vmem:[%s1 + $0x194] sm:$0xf]
    %v150 = vld [vmem:[%s1 + $0x198] sm:$0xf]
    %v151 = vld [vmem:[%s1 + $0x19c] sm:$0xf]
    %v152 = vld [vmem:[%s1 + $0x1a0] sm:$0xf]
    %v153 = vld [vmem:[%s1 + $0x1a4] sm:$0xf]
    %v154 = vld [vmem:[%s1 + $0x1a8] sm:$0xf]
    %v155 = vld [vmem:[%s1 + $0x1ac] sm:$0xf]
    %v156 = vld [vmem:[%s1 + $0x1b0] sm:$0xf]
    %v157 = vld [vmem:[%s1 + $0x1b4] sm:$0xf]
    %v158 = vld [vmem:[%s1 + $0x1b8] sm:$0xf]
    %v159 = vld [vmem:[%s1 + $0x1bc] sm:$0xf]
    %v160 = vld [vmem:[%s1 + $0x1c0] sm:$0xf]
    %v161 = vld [vmem:[%s1 + $0x1c4] sm:$0xf]
    %v162 = vld [vmem:[%s1 + $0x1c8] sm:$0xf]
    %v163 = vld [vmem:[%s1 + $0x1cc] sm:$0xf]
    %v164 = vld [vmem:[%s1 + $0x1d0] sm:$0xf]
    %v165 = vld [vmem:[%s1 + $0x1d4] sm:$0xf]
    %v166 = vld [vmem:[%s1 + $0x1d8] sm:$0xf]
    %v167 = vld [vmem:[%s1 + $0x1dc] sm:$0xf]
    %v168 = vld [vmem:[%s1 + $0x1e0] sm:$0xf]
    %v169 = vld [vmem:[%s1 + $0x1e4] sm:$0xf]
    %v170 = vld [vmem:[%s1 + $0x1e8] sm:$0xf]
    %v171 = vld [vmem:[%s1 + $0x1ec] sm:$0xf]
    %v172 = vld [vmem:[%s1 + $0x1f0] sm:$0xf]
    %v173 = vld [vmem:[%s1 + $0x1f4] sm:$0xf]
    %v174 = vld [vmem:[%s1 + $0x1f8] sm:$0xf]
    %v175 = vld [vmem:[%s1 + $0x1fc] sm:$0xf]
    %v176 = vld [vmem:[%s1 + $0x200] sm:$0xf]
    %v177 = vld [vmem:[%s1 + $0x204] sm:$0xf]
    %v178 = vld [vmem:[%s1 + $0x208] sm:$0xf]
    %v179 = vld [vmem:[%s1 + $0x20c] sm:$0xf]
    %v180 = vld [vmem:[%s1 + $0x210] sm:$0xf]
    %v181 = vld [vmem:[%s1 + $0x214] sm:$0xf]
    %v182 = vld [vmem:[%s1 + $0x218] sm:$0xf]
    %v183 = vld [vmem:[%s1 + $0x21c] sm:$0xf]
    %v184 = vld [vmem:[%s1 + $0x220] sm:$0xf]
    %v185 = vld [vmem:[%s1 + $0x224] sm:$0xf]
    %v186 = vld [vmem:[%s1 + $0x228] sm:$0xf]
    %v187 = vld [vmem:[%s1 + $0x22c] sm:$0xf]
    %v188 = vld [vmem:[%s1 + $0x230] sm:$0xf]
    %v189 = vld [vmem:[%s1 + $0x234] sm:$0xf]
    %v190 = vld [vmem:[%s1 + $0x238] sm:$0xf]
    %v191 = vld [vmem:[%s1 + $0x23c] sm:$0xf]
    %v192 = vld [vmem:[%s1 + $0x240] sm:$0xf]
    %v193 = vld [vmem:[%s1 + $0x244] sm:$0xf]
    %v194 = vld [vmem:[%s1 + $0x248] sm:$0xf]
    %v195 = vld [vmem:[%s1 + $0x24c] sm:$0xf]
    %v196 = vld [vmem:[%s1 + $0x250] sm:$0xf]
    %v197 = vld [vmem:[%s1 + $0x254] sm:$0xf]
    %v198 = vld [vmem:[%s1 + $0x258] sm:$0xf]
    %v199 = vld [vmem:[%s1 + $0x25c] sm:$0xf]
    %v200 = vld [vmem:[%s1 + $0x260] sm:$0xf]
    %v201 = vld [vmem:[%s1 + $0x264] sm:$0xf]
    %v202 = vld [vmem:[%s1 + $0x268] sm:$0xf]
    %v203 = vld [vmem:[%s1 + $0x26c] sm:$0xf]
    %v204 = vld [vmem:[%s1 + $0x270] sm:$0xf]
    %v205 = vld [vmem:[%s1 + $0x274] sm:$0xf]
    %v206 = vld [vmem:[%s1 + $0x278] sm:$0xf]
    %v207 = vld [vmem:[%s1 + $0x27c] sm:$0xf]
    %v208 = vld [vmem:[%s1 + $0x280] sm:$0xf]
    %v209 = vld [vmem:[%s1 + $0x284] sm:$0xf]
    %v210 = vld [vmem:[%s1 + $0x288] sm:$0xf]
    %v211 = vld [vmem:[%s1 + $0x28c] sm:$0xf]
    %v212 = vld [vmem:[%s1 + $0x290] sm:$0xf]
    %v213 = vld [vmem:[%s1 + $0x294] sm:$0xf]
    %v214 = vld [vmem:[%s1 + $0x298] sm:$0xf]
    %v215 = vld [vmem:[%s1 + $0x29c] sm:$0xf]
    %v216 = vld [vmem:[%s1 + $0x2a0] sm:$0xf]
    %v217 = vld [vmem:[%s1 + $0x2a4] sm:$0xf]
    %v218 = vld [vmem:[%s1 + $0x2a8] sm:$0xf]
    %v219 = vld [vmem:[%s1 + $0x2ac] sm:$0xf]
    %v220 = vld [vmem:[%s1 + $0x2b0] sm:$0xf]
    %v221 = vld [vmem:[%s1 + $0x2b4] sm:$0xf]
    %v222 = vld [vmem:[%s1 + $0x2b8] sm:$0xf]
    %v223 = vld [vmem:[%s1 + $0x2bc] sm:$0xf]
    %v224 = vld [vmem:[%s1 + $0x2c0] sm:$0xf]
    %v225 = vld [vmem:[%s1 + $0x2c4] sm:$0xf]
    %v226 = vld [vmem:[%s1 + $0x2c8] sm:$0xf]
    %v227 = vld [vmem:[%s1 + $0x2cc] sm:$0xf]
    %v228 = vld [vmem:[%s1 + $0x2d0] sm:$0xf]
    %v229 = vld [vmem:[%s1 + $0x2d4] sm:$0xf]
    %v230 = vld [vmem:[%s1 + $0x2d8] sm:$0xf]
    %v231 = vld [vmem:[%s1 + $0x2dc] sm:$0xf]
    %v232 = vld [vmem:[%s1 + $0x2e0] sm:$0xf]
    %v233 = vld [vmem:[%s1 + $0x2e4] sm:$0xf]
    %v234 = vld [vmem:[%s1 + $0x2e8] sm:$0xf]
    %v235 = vld [vmem:[%s1 + $0x2ec] sm:$0xf]
    %v236 = vld [vmem:[%s1 + $0x2f0] sm:$0xf]
    %v237 = vld [vmem:[%s1 + $0x2f4] sm:$0xf]
    %v238 = vld [vmem:[%s1 + $0x2f8] sm:$0xf]
    %v239 = vld [vmem:[%s1 + $0x2fc] sm:$0xf]
    %v240 = vld [vmem:[%s2] sm:$0xf]
    %v241 = vld [vmem:[%s2 + $0x4] sm:$0xf]
    %v242 = vld [vmem:[%s2 + $0x8] sm:$0xf]
    %v243 = vld [vmem:[%s2 + $0xc] sm:$0x3]
    %v244 = vld [vmem:[%s3] sm:$0x1]
    %v246 = vlaneseq
    %v247 = vshrl.u32 %v246, 7
    %v248 = vsub.s32 0, %v247
    %v249 = vrot.slane %v244, %v248
    %v443 = vunpack.c.l.b16 %v48
    %v444 = vunpack.c.l.b16 %v49
    %v445 = vunpack.c.l.b16 %v50
    %v446 = vunpack.c.l.b16 %v51
    %v447 = vunpack.c.l.b16 %v52
    %v448 = vunpack.c.l.b16 %v53
    %v449 = vunpack.c.l.b16 %v54
    %v450 = vunpack.c.l.b16 %v55
    %v451 = vunpack.c.l.b16 %v56
    %v452 = vunpack.c.l.b16 %v57
    %v453 = vunpack.c.l.b16 %v58
    %v454 = vunpack.c.l.b16 %v59
    %v455 = vunpack.c.l.b16 %v60
    %v456 = vunpack.c.l.b16 %v61
    %v457 = vunpack.c.l.b16 %v62
    %v458 = vunpack.c.l.b16 %v63
    %v459 = vunpack.c.l.b16 %v64
    %v460 = vunpack.c.l.b16 %v65
    %v461 = vunpack.c.l.b16 %v66
    %v462 = vunpack.c.l.b16 %v67
    %v463 = vunpack.c.l.b16 %v68
    %v464 = vunpack.c.l.b16 %v69
    %v465 = vunpack.c.l.b16 %v70
    %v466 = vunpack.c.l.b16 %v71
    %v467 = vunpack.c.l.b16 %v72
    %v468 = vunpack.c.l.b16 %v73
    %v469 = vunpack.c.l.b16 %v74
    %v470 = vunpack.c.l.b16 %v75
    %v471 = vunpack.c.l.b16 %v76
    %v472 = vunpack.c.l.b16 %v77
    %v473 = vunpack.c.l.b16 %v78
    %v474 = vunpack.c.l.b16 %v79
    %v475 = vunpack.c.l.b16 %v80
    %v476 = vunpack.c.l.b16 %v81
    %v477 = vunpack.c.l.b16 %v82
    %v478 = vunpack.c.l.b16 %v83
    %v479 = vunpack.c.l.b16 %v84
    %v480 = vunpack.c.l.b16 %v85
    %v481 = vunpack.c.l.b16 %v86
    %v482 = vunpack.c.l.b16 %v87
    %v483 = vunpack.c.l.b16 %v88
    %v484 = vunpack.c.l.b16 %v89
    %v485 = vunpack.c.l.b16 %v90
    %v486 = vunpack.c.l.b16 %v91
    %v487 = vunpack.c.l.b16 %v92
    %v488 = vunpack.c.l.b16 %v93
    %v489 = vunpack.c.l.b16 %v94
    %v490 = vunpack.c.l.b16 %v95
    %v491 = vunpack.c.l.b16 %v96
    %v492 = vunpack.c.l.b16 %v97
    %v493 = vunpack.c.l.b16 %v98
    %v494 = vunpack.c.l.b16 %v99
    %v495 = vunpack.c.l.b16 %v100
    %v496 = vunpack.c.l.b16 %v101
    %v497 = vunpack.c.l.b16 %v102
    %v498 = vunpack.c.l.b16 %v103
    %v499 = vunpack.c.l.b16 %v104
    %v500 = vunpack.c.l.b16 %v105
    %v501 = vunpack.c.l.b16 %v106
    %v502 = vunpack.c.l.b16 %v107
    %v503 = vunpack.c.l.b16 %v108
    %v504 = vunpack.c.l.b16 %v109
    %v505 = vunpack.c.l.b16 %v110
    %v506 = vunpack.c.l.b16 %v111
    %v507 = vunpack.c.l.b16 %v112
    %v508 = vunpack.c.l.b16 %v113
    %v509 = vunpack.c.l.b16 %v114
    %v510 = vunpack.c.l.b16 %v115
    %v511 = vunpack.c.l.b16 %v116
    %v512 = vunpack.c.l.b16 %v117
    %v513 = vunpack.c.l.b16 %v118
    %v514 = vunpack.c.l.b16 %v119
    %v515 = vunpack.c.l.b16 %v120
    %v516 = vunpack.c.l.b16 %v121
    %v517 = vunpack.c.l.b16 %v122
    %v518 = vunpack.c.l.b16 %v123
    %v519 = vunpack.c.l.b16 %v124
    %v520 = vunpack.c.l.b16 %v125
    %v521 = vunpack.c.l.b16 %v126
    %v522 = vunpack.c.l.b16 %v127
    %v523 = vunpack.c.l.b16 %v128
    %v524 = vunpack.c.l.b16 %v129
    %v525 = vunpack.c.l.b16 %v130
    %v526 = vunpack.c.l.b16 %v131
    %v527 = vunpack.c.l.b16 %v132
    %v528 = vunpack.c.l.b16 %v133
    %v529 = vunpack.c.l.b16 %v134
    %v530 = vunpack.c.l.b16 %v135
    %v531 = vunpack.c.l.b16 %v136
    %v532 = vunpack.c.l.b16 %v137
    %v533 = vunpack.c.l.b16 %v138
    %v534 = vunpack.c.l.b16 %v139
    %v535 = vunpack.c.l.b16 %v140
    %v536 = vunpack.c.l.b16 %v141
    %v537 = vunpack.c.l.b16 %v142
    %v538 = vunpack.c.l.b16 %v143
    %v539 = vunpack.c.l.b16 %v144
    %v540 = vunpack.c.l.b16 %v145
    %v541 = vunpack.c.l.b16 %v146
    %v542 = vunpack.c.l.b16 %v147
    %v543 = vunpack.c.l.b16 %v148
    %v544 = vunpack.c.l.b16 %v149
    %v545 = vunpack.c.l.b16 %v150
    %v546 = vunpack.c.l.b16 %v151
    %v547 = vunpack.c.l.b16 %v152
    %v548 = vunpack.c.l.b16 %v153
    %v549 = vunpack.c.l.b16 %v154
    %v550 = vunpack.c.l.b16 %v155
    %v551 = vunpack.c.l.b16 %v156
    %v552 = vunpack.c.l.b16 %v157
    %v553 = vunpack.c.l.b16 %v158
    %v554 = vunpack.c.l.b16 %v159
    %v555 = vunpack.c.l.b16 %v160
    %v556 = vunpack.c.l.b16 %v161
    %v557 = vunpack.c.l.b16 %v162
    %v558 = vunpack.c.l.b16 %v163
    %v559 = vunpack.c.l.b16 %v164
    %v560 = vunpack.c.l.b16 %v165
    %v561 = vunpack.c.l.b16 %v166
    %v562 = vunpack.c.l.b16 %v167
    %v563 = vunpack.c.l.b16 %v168
    %v564 = vunpack.c.l.b16 %v169
    %v565 = vunpack.c.l.b16 %v170
    %v566 = vunpack.c.l.b16 %v171
    %v567 = vunpack.c.l.b16 %v172
    %v568 = vunpack.c.l.b16 %v173
    %v569 = vunpack.c.l.b16 %v174
    %v570 = vunpack.c.l.b16 %v175
    %v571 = vunpack.c.l.b16 %v176
    %v572 = vunpack.c.l.b16 %v177
    %v573 = vunpack.c.l.b16 %v178
    %v574 = vunpack.c.l.b16 %v179
    %v575 = vunpack.c.l.b16 %v180
    %v576 = vunpack.c.l.b16 %v181
    %v577 = vunpack.c.l.b16 %v182
    %v578 = vunpack.c.l.b16 %v183
    %v579 = vunpack.c.l.b16 %v184
    %v580 = vunpack.c.l.b16 %v185
    %v581 = vunpack.c.l.b16 %v186
    %v582 = vunpack.c.l.b16 %v187
    %v583 = vunpack.c.l.b16 %v188
    %v584 = vunpack.c.l.b16 %v189
    %v585 = vunpack.c.l.b16 %v190
    %v586 = vunpack.c.l.b16 %v191
    %v587 = vunpack.c.l.b16 %v192
    %v588 = vunpack.c.l.b16 %v193
    %v589 = vunpack.c.l.b16 %v194
    %v590 = vunpack.c.l.b16 %v195
    %v591 = vunpack.c.l.b16 %v196
    %v592 = vunpack.c.l.b16 %v197
    %v593 = vunpack.c.l.b16 %v198
    %v594 = vunpack.c.l.b16 %v199
    %v595 = vunpack.c.l.b16 %v200
    %v596 = vunpack.c.l.b16 %v201
    %v597 = vunpack.c.l.b16 %v202
    %v598 = vunpack.c.l.b16 %v203
    %v599 = vunpack.c.l.b16 %v204
    %v600 = vunpack.c.l.b16 %v205
    %v601 = vunpack.c.l.b16 %v206
    %v602 = vunpack.c.l.b16 %v207
    %v603 = vunpack.c.l.b16 %v208
    %v604 = vunpack.c.l.b16 %v209
    %v605 = vunpack.c.l.b16 %v210
    %v606 = vunpack.c.l.b16 %v211
    %v607 = vunpack.c.l.b16 %v212
    %v608 = vunpack.c.l.b16 %v213
    %v609 = vunpack.c.l.b16 %v214
    %v610 = vunpack.c.l.b16 %v215
    %v611 = vunpack.c.l.b16 %v216
    %v612 = vunpack.c.l.b16 %v217
    %v613 = vunpack.c.l.b16 %v218
    %v614 = vunpack.c.l.b16 %v219
    %v615 = vunpack.c.l.b16 %v220
    %v616 = vunpack.c.l.b16 %v221
    %v617 = vunpack.c.l.b16 %v222
    %v618 = vunpack.c.l.b16 %v223
    %v619 = vunpack.c.l.b16 %v224
    %v620 = vunpack.c.l.b16 %v225
    %v621 = vunpack.c.l.b16 %v226
    %v622 = vunpack.c.l.b16 %v227
    %v623 = vunpack.c.l.b16 %v228
    %v624 = vunpack.c.l.b16 %v229
    %v625 = vunpack.c.l.b16 %v230
    %v626 = vunpack.c.l.b16 %v231
    %v627 = vunpack.c.l.b16 %v232
    %v628 = vunpack.c.l.b16 %v233
    %v629 = vunpack.c.l.b16 %v234
    %v630 = vunpack.c.l.b16 %v235
    %v631 = vunpack.c.l.b16 %v236
    %v632 = vunpack.c.l.b16 %v237
    %v633 = vunpack.c.l.b16 %v238
    %v634 = vunpack.c.l.b16 %v239
    %v635 = vpack.c.b16 %v444, %v443
    %v636 = vpack.c.b16 %v446, %v445
    %v637 = vpack.c.b16 %v448, %v447
    %v638 = vpack.c.b16 %v450, %v449
    %v639 = vpack.c.b16 %v452, %v451
    %v640 = vpack.c.b16 %v454, %v453
    %v641 = vpack.c.b16 %v456, %v455
    %v642 = vpack.c.b16 %v458, %v457
    %v643 = vpack.c.b16 %v460, %v459
    %v644 = vpack.c.b16 %v462, %v461
    %v645 = vpack.c.b16 %v464, %v463
    %v646 = vpack.c.b16 %v466, %v465
    %v647 = vpack.c.b16 %v468, %v467
    %v648 = vpack.c.b16 %v470, %v469
    %v649 = vpack.c.b16 %v472, %v471
    %v650 = vpack.c.b16 %v474, %v473
    %v651 = vpack.c.b16 %v476, %v475
    %v652 = vpack.c.b16 %v478, %v477
    %v653 = vpack.c.b16 %v480, %v479
    %v654 = vpack.c.b16 %v482, %v481
    %v655 = vpack.c.b16 %v484, %v483
    %v656 = vpack.c.b16 %v486, %v485
    %v657 = vpack.c.b16 %v488, %v487
    %v658 = vpack.c.b16 %v490, %v489
    %v659 = vpack.c.b16 %v492, %v491
    %v660 = vpack.c.b16 %v494, %v493
    %v661 = vpack.c.b16 %v496, %v495
    %v662 = vpack.c.b16 %v498, %v497
    %v663 = vpack.c.b16 %v500, %v499
    %v664 = vpack.c.b16 %v502, %v501
    %v665 = vpack.c.b16 %v504, %v503
    %v666 = vpack.c.b16 %v506, %v505
    %v667 = vpack.c.b16 %v508, %v507
    %v668 = vpack.c.b16 %v510, %v509
    %v669 = vpack.c.b16 %v512, %v511
    %v670 = vpack.c.b16 %v514, %v513
    %v671 = vpack.c.b16 %v516, %v515
    %v672 = vpack.c.b16 %v518, %v517
    %v673 = vpack.c.b16 %v520, %v519
    %v674 = vpack.c.b16 %v522, %v521
    %v675 = vpack.c.b16 %v524, %v523
    %v676 = vpack.c.b16 %v526, %v525
    %v677 = vpack.c.b16 %v528, %v527
    %v678 = vpack.c.b16 %v530, %v529
    %v679 = vpack.c.b16 %v532, %v531
    %v680 = vpack.c.b16 %v534, %v533
    %v681 = vpack.c.b16 %v536, %v535
    %v682 = vpack.c.b16 %v538, %v537
    %v683 = vpack.c.b16 %v540, %v539
    %v684 = vpack.c.b16 %v542, %v541
    %v685 = vpack.c.b16 %v544, %v543
    %v686 = vpack.c.b16 %v546, %v545
    %v687 = vpack.c.b16 %v548, %v547
    %v688 = vpack.c.b16 %v550, %v549
    %v689 = vpack.c.b16 %v552, %v551
    %v690 = vpack.c.b16 %v554, %v553
    %v691 = vpack.c.b16 %v556, %v555
    %v692 = vpack.c.b16 %v558, %v557
    %v693 = vpack.c.b16 %v560, %v559
    %v694 = vpack.c.b16 %v562, %v561
    %v695 = vpack.c.b16 %v564, %v563
    %v696 = vpack.c.b16 %v566, %v565
    %v697 = vpack.c.b16 %v568, %v567
    %v698 = vpack.c.b16 %v570, %v569
    %v699 = vpack.c.b16 %v572, %v571
    %v700 = vpack.c.b16 %v574, %v573
    %v701 = vpack.c.b16 %v576, %v575
    %v702 = vpack.c.b16 %v578, %v577
    %v703 = vpack.c.b16 %v580, %v579
    %v704 = vpack.c.b16 %v582, %v581
    %v705 = vpack.c.b16 %v584, %v583
    %v706 = vpack.c.b16 %v586, %v585
    %v707 = vpack.c.b16 %v588, %v587
    %v708 = vpack.c.b16 %v590, %v589
    %v709 = vpack.c.b16 %v592, %v591
    %v710 = vpack.c.b16 %v594, %v593
    %v711 = vpack.c.b16 %v596, %v595
    %v712 = vpack.c.b16 %v598, %v597
    %v713 = vpack.c.b16 %v600, %v599
    %v714 = vpack.c.b16 %v602, %v601
    %v715 = vpack.c.b16 %v604, %v603
    %v716 = vpack.c.b16 %v606, %v605
    %v717 = vpack.c.b16 %v608, %v607
    %v718 = vpack.c.b16 %v610, %v609
    %v719 = vpack.c.b16 %v612, %v611
    %v720 = vpack.c.b16 %v614, %v613
    %v721 = vpack.c.b16 %v616, %v615
    %v722 = vpack.c.b16 %v618, %v617
    %v723 = vpack.c.b16 %v620, %v619
    %v724 = vpack.c.b16 %v622, %v621
    %v725 = vpack.c.b16 %v624, %v623
    %v726 = vpack.c.b16 %v626, %v625
    %v727 = vpack.c.b16 %v628, %v627
    %v728 = vpack.c.b16 %v630, %v629
    %v729 = vpack.c.b16 %v632, %v631
    %v730 = vpack.c.b16 %v634, %v633
    %v735 = vunpack.c.l.b16 %v240
    %v736 = vunpack.c.l.b16 %v241
    %v737 = vunpack.c.l.b16 %v242
    %v738 = vunpack.c.l.b16 %v243
    %v739 = vpack.c.b16 %v736, %v735
    %v740 = vpack.c.b16 %v738, %v737
    %vm742 = vcmask 220160
    %v744 = vsel %vm742, %v635, 0
    %v747 = vsel %vm742, %v636, 0
    %v750 = vsel %vm742, %v637, 0
    %v753 = vsel %vm742, %v638, 0
    %v756 = vsel %vm742, %v639, 0
    %v759 = vsel %vm742, %v640, 0
    %v762 = vsel %vm742, %v641, 0
    %v765 = vsel %vm742, %v642, 0
    %v768 = vsel %vm742, %v643, 0
    %v771 = vsel %vm742, %v644, 0
    %v774 = vsel %vm742, %v645, 0
    %v777 = vsel %vm742, %v646, 0
    %v780 = vsel %vm742, %v647, 0
    %v783 = vsel %vm742, %v648, 0
    %v786 = vsel %vm742, %v649, 0
    %v789 = vsel %vm742, %v650, 0
    %v792 = vsel %vm742, %v651, 0
    %v795 = vsel %vm742, %v652, 0
    %v798 = vsel %vm742, %v653, 0
    %v801 = vsel %vm742, %v654, 0
    %v804 = vsel %vm742, %v655, 0
    %v807 = vsel %vm742, %v656, 0
    %v810 = vsel %vm742, %v657, 0
    %v813 = vsel %vm742, %v658, 0
    %v816 = vsel %vm742, %v659, 0
    %v819 = vsel %vm742, %v660, 0
    %v822 = vsel %vm742, %v661, 0
    %v825 = vsel %vm742, %v662, 0
    %v828 = vsel %vm742, %v663, 0
    %v831 = vsel %vm742, %v664, 0
    %v834 = vsel %vm742, %v665, 0
    %v837 = vsel %vm742, %v666, 0
    %v840 = vsel %vm742, %v667, 0
    %v843 = vsel %vm742, %v668, 0
    %v846 = vsel %vm742, %v669, 0
    %v849 = vsel %vm742, %v670, 0
    %v852 = vsel %vm742, %v671, 0
    %v855 = vsel %vm742, %v672, 0
    %v858 = vsel %vm742, %v673, 0
    %v861 = vsel %vm742, %v674, 0
    %v864 = vsel %vm742, %v675, 0
    %v867 = vsel %vm742, %v676, 0
    %v870 = vsel %vm742, %v677, 0
    %v873 = vsel %vm742, %v678, 0
    %v876 = vsel %vm742, %v679, 0
    %v879 = vsel %vm742, %v680, 0
    %v882 = vsel %vm742, %v681, 0
    %v885 = vsel %vm742, %v682, 0
    %v888 = vsel %vm742, %v683, 0
    %v891 = vsel %vm742, %v684, 0
    %v894 = vsel %vm742, %v685, 0
    %v897 = vsel %vm742, %v686, 0
    %v900 = vsel %vm742, %v687, 0
    %v903 = vsel %vm742, %v688, 0
    %v906 = vsel %vm742, %v689, 0
    %v909 = vsel %vm742, %v690, 0
    %v912 = vsel %vm742, %v691, 0
    %v915 = vsel %vm742, %v692, 0
    %v918 = vsel %vm742, %v693, 0
    %v921 = vsel %vm742, %v694, 0
    %v924 = vsel %vm742, %v695, 0
    %v927 = vsel %vm742, %v696, 0
    %v930 = vsel %vm742, %v697, 0
    %v933 = vsel %vm742, %v698, 0
    %v936 = vsel %vm742, %v699, 0
    %v939 = vsel %vm742, %v700, 0
    %v942 = vsel %vm742, %v701, 0
    %v945 = vsel %vm742, %v702, 0
    %v948 = vsel %vm742, %v703, 0
    %v951 = vsel %vm742, %v704, 0
    %v954 = vsel %vm742, %v705, 0
    %v957 = vsel %vm742, %v706, 0
    %v960 = vsel %vm742, %v707, 0
    %v963 = vsel %vm742, %v708, 0
    %v966 = vsel %vm742, %v709, 0
    %v969 = vsel %vm742, %v710, 0
    %v972 = vsel %vm742, %v711, 0
    %v975 = vsel %vm742, %v712, 0
    %v978 = vsel %vm742, %v713, 0
    %v981 = vsel %vm742, %v714, 0
    %v984 = vsel %vm742, %v715, 0
    %v987 = vsel %vm742, %v716, 0
    %v990 = vsel %vm742, %v717, 0
    %v993 = vsel %vm742, %v718, 0
    %v996 = vsel %vm742, %v719, 0
    %v999 = vsel %vm742, %v720, 0
    %v1002 = vsel %vm742, %v721, 0
    %v1005 = vsel %vm742, %v722, 0
    %v1008 = vsel %vm742, %v723, 0
    %v1011 = vsel %vm742, %v724, 0
    %v1014 = vsel %vm742, %v725, 0
    %v1017 = vsel %vm742, %v726, 0
    %v1020 = vsel %vm742, %v727, 0
    %v1023 = vsel %vm742, %v728, 0
    %v1026 = vsel %vm742, %v729, 0
    %v1029 = vsel %vm742, %v730, 0
    %vm1031 = vcmask 1044480
    %vm1032 = vcmask 1045504
    %v1033 = vsel %vm1031, 4294967295, 65535
    %v1034 = vsel %vm1032, %v1033, 0
    %v1036 = vand.u32 %v740, %v1034
    %1038 = vmatprep.subr.bf16.mxu0 0
    %1039 = vmatpush1.bf16.msra.mxu0 %v739
    %1040 = vmatprep.subr.bf16.mxu0 0
    %1041 = vmatpush1.bf16.msra.mxu0 %v1036
    %1042 = vmatprep.subr.bf16.mxu0 0
    %1043 = vmatpush1.bf16.msra.mxu0 0
    %1044 = vmatprep.subr.bf16.mxu0 0
    %1045 = vmatpush1.bf16.msra.mxu0 0
    %1046 = vmatprep.subr.bf16.mxu0 0
    %1047 = vmatpush1.bf16.msra.mxu0 0
    %1048 = vmatprep.subr.bf16.mxu0 0
    %1049 = vmatpush1.bf16.msra.mxu0 0
    %1050 = vmatprep.subr.bf16.mxu0 0
    %1051 = vmatpush1.bf16.msra.mxu0 0
    %1052 = vmatprep.subr.bf16.mxu0 0
    %1053 = vmatpush1.bf16.msra.mxu0 0
    %1054 = vmatprep.subr.bf16.mxu0 0
    %1055 = vmatpush1.bf16.msra.mxu0 0
    %1056 = vmatprep.subr.bf16.mxu0 0
    %1057 = vmatpush1.bf16.msra.mxu0 0
    %1058 = vmatprep.subr.bf16.mxu0 0
    %1059 = vmatpush1.bf16.msra.mxu0 0
    %1060 = vmatprep.subr.bf16.mxu0 0
    %1061 = vmatpush1.bf16.msra.mxu0 0
    %1062 = vmatprep.subr.bf16.mxu0 0
    %1063 = vmatpush1.bf16.msra.mxu0 0
    %1064 = vmatprep.subr.bf16.mxu0 0
    %1065 = vmatpush1.bf16.msra.mxu0 0
    %1066 = vmatprep.subr.bf16.mxu0 0
    %1067 = vmatpush1.bf16.msra.mxu0 0
    %1068 = vmatprep.subr.bf16.mxu0 0
    %1069 = vmatpush1.bf16.msra.mxu0 0
    %1070 = vmatprep.mubr.bf16.mxu0 0
    %1071 = vmatmul.mubr.bf16.gmra.mrb[0].mxu0 %v744
    %v1072 = vpop.f32.mrb[0].mxu0
    %v1073 = vadd.f32 %v249, %v1072
    %v1074 = vpop.f32.mrb[0].mxu0
    %v1075 = vpop.f32.mrb[0].mxu0
    %v1076 = vadd.f32 %v249, %v1075
    %v1077 = vpop.f32.mrb[0].mxu0
    %1078 = vmatprep.mubr.bf16.mxu0 0
    %1079 = vmatmul.mubr.bf16.gmra.mrb[0].mxu0 %v747
    %v1080 = vpop.f32.mrb[0].mxu0
    %v1081 = vadd.f32 %v249, %v1080
    %v1082 = vpop.f32.mrb[0].mxu0
    %v1083 = vpop.f32.mrb[0].mxu0
    %v1084 = vadd.f32 %v249, %v1083
    %v1085 = vpop.f32.mrb[0].mxu0
    %1086 = vmatprep.mubr.bf16.mxu0 0
    %1087 = vmatmul.mubr.bf16.gmra.mrb[0].mxu0 %v750
    %v1088 = vpop.f32.mrb[0].mxu0
    %v1089 = vadd.f32 %v249, %v1088
    %v1090 = vpop.f32.mrb[0].mxu0
    %v1091 = vpop.f32.mrb[0].mxu0
    %v1092 = vadd.f32 %v249, %v1091
    %v1093 = vpop.f32.mrb[0].mxu0
    %1094 = vmatprep.mubr.bf16.mxu0 0
    %1095 = vmatmul.mubr.bf16.gmra.mrb[0].mxu0 %v753
    %v1096 = vpop.f32.mrb[0].mxu0
    %v1097 = vadd.f32 %v249, %v1096
    %v1098 = vpop.f32.mrb[0].mxu0
    %v1099 = vpop.f32.mrb[0].mxu0
    %v1100 = vadd.f32 %v249, %v1099
    %v1101 = vpop.f32.mrb[0].mxu0
    %1102 = vmatprep.mubr.bf16.mxu0 0
    %1103 = vmatmul.mubr.bf16.gmra.mrb[0].mxu0 %v756
    %v1104 = vpop.f32.mrb[0].mxu0
    %v1105 = vadd.f32 %v249, %v1104
    %v1106 = vpop.f32.mrb[0].mxu0
    %v1107 = vpop.f32.mrb[0].mxu0
    %v1108 = vadd.f32 %v249, %v1107
    %v1109 = vpop.f32.mrb[0].mxu0
    %1110 = vmatprep.mubr.bf16.mxu0 0
    %1111 = vmatmul.mubr.bf16.gmra.mrb[0].mxu0 %v759
    %v1112 = vpop.f32.mrb[0].mxu0
    %v1113 = vadd.f32 %v249, %v1112
    %v1114 = vpop.f32.mrb[0].mxu0
    %v1115 = vpop.f32.mrb[0].mxu0
    %v1116 = vadd.f32 %v249, %v1115
    %v1117 = vpop.f32.mrb[0].mxu0
    %1118 = vmatprep.mubr.bf16.mxu0 0
    %1119 = vmatmul.mubr.bf16.gmra.mrb[0].mxu0 %v762
    %v1120 = vpop.f32.mrb[0].mxu0
    %v1121 = vadd.f32 %v249, %v1120
    %v1122 = vpop.f32.mrb[0].mxu0
    %v1123 = vpop.f32.mrb[0].mxu0
    %v1124 = vadd.f32 %v249, %v1123
    %v1125 = vpop.f32.mrb[0].mxu0
    %1126 = vmatprep.mubr.bf16.mxu0 0
    %1127 = vmatmul.mubr.bf16.gmra.mrb[0].mxu0 %v765
    %v1128 = vpop.f32.mrb[0].mxu0
    %v1129 = vadd.f32 %v249, %v1128
    %v1130 = vpop.f32.mrb[0].mxu0
    %v1131 = vpop.f32.mrb[0].mxu0
    %v1132 = vadd.f32 %v249, %v1131
    %v1133 = vpop.f32.mrb[0].mxu0
    %1134 = vmatprep.mubr.bf16.mxu0 0
    %1135 = vmatmul.mubr.bf16.gmra.mrb[0].mxu0 %v768
    %v1136 = vpop.f32.mrb[0].mxu0
    %v1137 = vadd.f32 %v249, %v1136
    %v1138 = vpop.f32.mrb[0].mxu0
    %v1139 = vpop.f32.mrb[0].mxu0
    %v1140 = vadd.f32 %v249, %v1139
    %v1141 = vpop.f32.mrb[0].mxu0
    %1142 = vmatprep.mubr.bf16.mxu0 0
    %1143 = vmatmul.mubr.bf16.gmra.mrb[0].mxu0 %v771
    %v1144 = vpop.f32.mrb[0].mxu0
    %v1145 = vadd.f32 %v249, %v1144
    %v1146 = vpop.f32.mrb[0].mxu0
    %v1147 = vpop.f32.mrb[0].mxu0
    %v1148 = vadd.f32 %v249, %v1147
    %v1149 = vpop.f32.mrb[0].mxu0
    %1150 = vmatprep.mubr.bf16.mxu0 0
    %1151 = vmatmul.mubr.bf16.gmra.mrb[0].mxu0 %v774
    %v1152 = vpop.f32.mrb[0].mxu0
    %v1153 = vadd.f32 %v249, %v1152
    %v1154 = vpop.f32.mrb[0].mxu0
    %v1155 = vpop.f32.mrb[0].mxu0
    %v1156 = vadd.f32 %v249, %v1155
    %v1157 = vpop.f32.mrb[0].mxu0
    %1158 = vmatprep.mubr.bf16.mxu0 0
    %1159 = vmatmul.mubr.bf16.gmra.mrb[0].mxu0 %v777
    %v1160 = vpop.f32.mrb[0].mxu0
    %v1161 = vadd.f32 %v249, %v1160
    %v1162 = vpop.f32.mrb[0].mxu0
    %v1163 = vpop.f32.mrb[0].mxu0
    %v1164 = vadd.f32 %v249, %v1163
    %v1165 = vpop.f32.mrb[0].mxu0
    %1166 = vmatprep.mubr.bf16.mxu0 0
    %1167 = vmatmul.mubr.bf16.gmra.mrb[0].mxu0 %v780
    %v1168 = vpop.f32.mrb[0].mxu0
    %v1169 = vadd.f32 %v249, %v1168
    %v1170 = vpop.f32.mrb[0].mxu0
    %v1171 = vpop.f32.mrb[0].mxu0
    %v1172 = vadd.f32 %v249, %v1171
    %v1173 = vpop.f32.mrb[0].mxu0
    %1174 = vmatprep.mubr.bf16.mxu0 0
    %1175 = vmatmul.mubr.bf16.gmra.mrb[0].mxu0 %v783
    %v1176 = vpop.f32.mrb[0].mxu0
    %v1177 = vadd.f32 %v249, %v1176
    %v1178 = vpop.f32.mrb[0].mxu0
    %v1179 = vpop.f32.mrb[0].mxu0
    %v1180 = vadd.f32 %v249, %v1179
    %v1181 = vpop.f32.mrb[0].mxu0
    %1182 = vmatprep.mubr.bf16.mxu0 0
    %1183 = vmatmul.mubr.bf16.gmra.mrb[0].mxu0 %v786
    %v1184 = vpop.f32.mrb[0].mxu0
    %v1185 = vadd.f32 %v249, %v1184
    %v1186 = vpop.f32.mrb[0].mxu0
    %v1187 = vpop.f32.mrb[0].mxu0
    %v1188 = vadd.f32 %v249, %v1187
    %v1189 = vpop.f32.mrb[0].mxu0
    %1190 = vmatprep.mubr.bf16.mxu0 0
    %1191 = vmatmul.mubr.bf16.gmra.mrb[0].mxu0 %v789
    %v1192 = vpop.f32.mrb[0].mxu0
    %v1193 = vadd.f32 %v249, %v1192
    %v1194 = vpop.f32.mrb[0].mxu0
    %v1195 = vpop.f32.mrb[0].mxu0
    %v1196 = vadd.f32 %v249, %v1195
    %v1197 = vpop.f32.mrb[0].mxu0
    %1198 = vmatprep.mubr.bf16.mxu0 0
    %1199 = vmatmul.mubr.bf16.gmra.mrb[0].mxu0 %v792
    %v1200 = vpop.f32.mrb[0].mxu0
    %v1201 = vadd.f32 %v249, %v1200
    %v1202 = vpop.f32.mrb[0].mxu0
    %v1203 = vpop.f32.mrb[0].mxu0
    %v1204 = vadd.f32 %v249, %v1203
    %v1205 = vpop.f32.mrb[0].mxu0
    %1206 = vmatprep.mubr.bf16.mxu0 0
    %1207 = vmatmul.mubr.bf16.gmra.mrb[0].mxu0 %v795
    %v1208 = vpop.f32.mrb[0].mxu0
    %v1209 = vadd.f32 %v249, %v1208
    %v1210 = vpop.f32.mrb[0].mxu0
    %v1211 = vpop.f32.mrb[0].mxu0
    %v1212 = vadd.f32 %v249, %v1211
    %v1213 = vpop.f32.mrb[0].mxu0
    %1214 = vmatprep.mubr.bf16.mxu0 0
    %1215 = vmatmul.mubr.bf16.gmra.mrb[0].mxu0 %v798
    %v1216 = vpop.f32.mrb[0].mxu0
    %v1217 = vadd.f32 %v249, %v1216
    %v1218 = vpop.f32.mrb[0].mxu0
    %v1219 = vpop.f32.mrb[0].mxu0
    %v1220 = vadd.f32 %v249, %v1219
    %v1221 = vpop.f32.mrb[0].mxu0
    %1222 = vmatprep.mubr.bf16.mxu0 0
    %1223 = vmatmul.mubr.bf16.gmra.mrb[0].mxu0 %v801
    %v1224 = vpop.f32.mrb[0].mxu0
    %v1225 = vadd.f32 %v249, %v1224
    %v1226 = vpop.f32.mrb[0].mxu0
    %v1227 = vpop.f32.mrb[0].mxu0
    %v1228 = vadd.f32 %v249, %v1227
    %v1229 = vpop.f32.mrb[0].mxu0
    %1230 = vmatprep.mubr.bf16.mxu0 0
    %1231 = vmatmul.mubr.bf16.gmra.mrb[0].mxu0 %v804
    %v1232 = vpop.f32.mrb[0].mxu0
    %v1233 = vadd.f32 %v249, %v1232
    %v1234 = vpop.f32.mrb[0].mxu0
    %v1235 = vpop.f32.mrb[0].mxu0
    %v1236 = vadd.f32 %v249, %v1235
    %v1237 = vpop.f32.mrb[0].mxu0
    %1238 = vmatprep.mubr.bf16.mxu0 0
    %1239 = vmatmul.mubr.bf16.gmra.mrb[0].mxu0 %v807
    %v1240 = vpop.f32.mrb[0].mxu0
    %v1241 = vadd.f32 %v249, %v1240
    %v1242 = vpop.f32.mrb[0].mxu0
    %v1243 = vpop.f32.mrb[0].mxu0
    %v1244 = vadd.f32 %v249, %v1243
    %v1245 = vpop.f32.mrb[0].mxu0
    %1246 = vmatprep.mubr.bf16.mxu0 0
    %1247 = vmatmul.mubr.bf16.gmra.mrb[0].mxu0 %v810
    %v1248 = vpop.f32.mrb[0].mxu0
    %v1249 = vadd.f32 %v249, %v1248
    %v1250 = vpop.f32.mrb[0].mxu0
    %v1251 = vpop.f32.mrb[0].mxu0
    %v1252 = vadd.f32 %v249, %v1251
    %v1253 = vpop.f32.mrb[0].mxu0
    %1254 = vmatprep.mubr.bf16.mxu0 0
    %1255 = vmatmul.mubr.bf16.gmra.mrb[0].mxu0 %v813
    %v1256 = vpop.f32.mrb[0].mxu0
    %v1257 = vadd.f32 %v249, %v1256
    %v1258 = vpop.f32.mrb[0].mxu0
    %v1259 = vpop.f32.mrb[0].mxu0
    %v1260 = vadd.f32 %v249, %v1259
    %v1261 = vpop.f32.mrb[0].mxu0
    %1262 = vmatprep.mubr.bf16.mxu0 0
    %1263 = vmatmul.mubr.bf16.gmra.mrb[0].mxu0 %v816
    %v1264 = vpop.f32.mrb[0].mxu0
    %v1265 = vadd.f32 %v249, %v1264
    %v1266 = vpop.f32.mrb[0].mxu0
    %v1267 = vpop.f32.mrb[0].mxu0
    %v1268 = vadd.f32 %v249, %v1267
    %v1269 = vpop.f32.mrb[0].mxu0
    %1270 = vmatprep.mubr.bf16.mxu0 0
    %1271 = vmatmul.mubr.bf16.gmra.mrb[0].mxu0 %v819
    %v1272 = vpop.f32.mrb[0].mxu0
    %v1273 = vadd.f32 %v249, %v1272
    %v1274 = vpop.f32.mrb[0].mxu0
    %v1275 = vpop.f32.mrb[0].mxu0
    %v1276 = vadd.f32 %v249, %v1275
    %v1277 = vpop.f32.mrb[0].mxu0
    %1278 = vmatprep.mubr.bf16.mxu0 0
    %1279 = vmatmul.mubr.bf16.gmra.mrb[0].mxu0 %v822
    %v1280 = vpop.f32.mrb[0].mxu0
    %v1281 = vadd.f32 %v249, %v1280
    %v1282 = vpop.f32.mrb[0].mxu0
    %v1283 = vpop.f32.mrb[0].mxu0
    %v1284 = vadd.f32 %v249, %v1283
    %v1285 = vpop.f32.mrb[0].mxu0
    %1286 = vmatprep.mubr.bf16.mxu0 0
    %1287 = vmatmul.mubr.bf16.gmra.mrb[0].mxu0 %v825
    %v1288 = vpop.f32.mrb[0].mxu0
    %v1289 = vadd.f32 %v249, %v1288
    %v1290 = vpop.f32.mrb[0].mxu0
    %v1291 = vpop.f32.mrb[0].mxu0
    %v1292 = vadd.f32 %v249, %v1291
    %v1293 = vpop.f32.mrb[0].mxu0
    %1294 = vmatprep.mubr.bf16.mxu0 0
    %1295 = vmatmul.mubr.bf16.gmra.mrb[0].mxu0 %v828
    %v1296 = vpop.f32.mrb[0].mxu0
    %v1297 = vadd.f32 %v249, %v1296
    %v1298 = vpop.f32.mrb[0].mxu0
    %v1299 = vpop.f32.mrb[0].mxu0
    %v1300 = vadd.f32 %v249, %v1299
    %v1301 = vpop.f32.mrb[0].mxu0
    %1302 = vmatprep.mubr.bf16.mxu0 0
    %1303 = vmatmul.mubr.bf16.gmra.mrb[0].mxu0 %v831
    %v1304 = vpop.f32.mrb[0].mxu0
    %v1305 = vadd.f32 %v249, %v1304
    %v1306 = vpop.f32.mrb[0].mxu0
    %v1307 = vpop.f32.mrb[0].mxu0
    %v1308 = vadd.f32 %v249, %v1307
    %v1309 = vpop.f32.mrb[0].mxu0
    %1310 = vmatprep.mubr.bf16.mxu0 0
    %1311 = vmatmul.mubr.bf16.gmra.mrb[0].mxu0 %v834
    %v1312 = vpop.f32.mrb[0].mxu0
    %v1313 = vadd.f32 %v249, %v1312
    %v1314 = vpop.f32.mrb[0].mxu0
    %v1315 = vpop.f32.mrb[0].mxu0
    %v1316 = vadd.f32 %v249, %v1315
    %v1317 = vpop.f32.mrb[0].mxu0
    %1318 = vmatprep.mubr.bf16.mxu0 0
    %1319 = vmatmul.mubr.bf16.gmra.mrb[0].mxu0 %v837
    %v1320 = vpop.f32.mrb[0].mxu0
    %v1321 = vadd.f32 %v249, %v1320
    %v1322 = vpop.f32.mrb[0].mxu0
    %v1323 = vpop.f32.mrb[0].mxu0
    %v1324 = vadd.f32 %v249, %v1323
    %v1325 = vpop.f32.mrb[0].mxu0
    %1326 = vmatprep.mubr.bf16.mxu0 0
    %1327 = vmatmul.mubr.bf16.gmra.mrb[0].mxu0 %v840
    %v1328 = vpop.f32.mrb[0].mxu0
    %v1329 = vadd.f32 %v249, %v1328
    %v1330 = vpop.f32.mrb[0].mxu0
    %v1331 = vpop.f32.mrb[0].mxu0
    %v1332 = vadd.f32 %v249, %v1331
    %v1333 = vpop.f32.mrb[0].mxu0
    %1334 = vmatprep.mubr.bf16.mxu0 0
    %1335 = vmatmul.mubr.bf16.gmra.mrb[0].mxu0 %v843
    %v1336 = vpop.f32.mrb[0].mxu0
    %v1337 = vadd.f32 %v249, %v1336
    %v1338 = vpop.f32.mrb[0].mxu0
    %v1339 = vpop.f32.mrb[0].mxu0
    %v1340 = vadd.f32 %v249, %v1339
    %v1341 = vpop.f32.mrb[0].mxu0
    %1342 = vmatprep.mubr.bf16.mxu0 0
    %1343 = vmatmul.mubr.bf16.gmra.mrb[0].mxu0 %v846
    %v1344 = vpop.f32.mrb[0].mxu0
    %v1345 = vadd.f32 %v249, %v1344
    %v1346 = vpop.f32.mrb[0].mxu0
    %v1347 = vpop.f32.mrb[0].mxu0
    %v1348 = vadd.f32 %v249, %v1347
    %v1349 = vpop.f32.mrb[0].mxu0
    %1350 = vmatprep.mubr.bf16.mxu0 0
    %1351 = vmatmul.mubr.bf16.gmra.mrb[0].mxu0 %v849
    %v1352 = vpop.f32.mrb[0].mxu0
    %v1353 = vadd.f32 %v249, %v1352
    %v1354 = vpop.f32.mrb[0].mxu0
    %v1355 = vpop.f32.mrb[0].mxu0
    %v1356 = vadd.f32 %v249, %v1355
    %v1357 = vpop.f32.mrb[0].mxu0
    %1358 = vmatprep.mubr.bf16.mxu0 0
    %1359 = vmatmul.mubr.bf16.gmra.mrb[0].mxu0 %v852
    %v1360 = vpop.f32.mrb[0].mxu0
    %v1361 = vadd.f32 %v249, %v1360
    %v1362 = vpop.f32.mrb[0].mxu0
    %v1363 = vpop.f32.mrb[0].mxu0
    %v1364 = vadd.f32 %v249, %v1363
    %v1365 = vpop.f32.mrb[0].mxu0
    %1366 = vmatprep.mubr.bf16.mxu0 0
    %1367 = vmatmul.mubr.bf16.gmra.mrb[0].mxu0 %v855
    %v1368 = vpop.f32.mrb[0].mxu0
    %v1369 = vadd.f32 %v249, %v1368
    %v1370 = vpop.f32.mrb[0].mxu0
    %v1371 = vpop.f32.mrb[0].mxu0
    %v1372 = vadd.f32 %v249, %v1371
    %v1373 = vpop.f32.mrb[0].mxu0
    %1374 = vmatprep.mubr.bf16.mxu0 0
    %1375 = vmatmul.mubr.bf16.gmra.mrb[0].mxu0 %v858
    %v1376 = vpop.f32.mrb[0].mxu0
    %v1377 = vadd.f32 %v249, %v1376
    %v1378 = vpop.f32.mrb[0].mxu0
    %v1379 = vpop.f32.mrb[0].mxu0
    %v1380 = vadd.f32 %v249, %v1379
    %v1381 = vpop.f32.mrb[0].mxu0
    %1382 = vmatprep.mubr.bf16.mxu0 0
    %1383 = vmatmul.mubr.bf16.gmra.mrb[0].mxu0 %v861
    %v1384 = vpop.f32.mrb[0].mxu0
    %v1385 = vadd.f32 %v249, %v1384
    %v1386 = vpop.f32.mrb[0].mxu0
    %v1387 = vpop.f32.mrb[0].mxu0
    %v1388 = vadd.f32 %v249, %v1387
    %v1389 = vpop.f32.mrb[0].mxu0
    %1390 = vmatprep.mubr.bf16.mxu0 0
    %1391 = vmatmul.mubr.bf16.gmra.mrb[0].mxu0 %v864
    %v1392 = vpop.f32.mrb[0].mxu0
    %v1393 = vadd.f32 %v249, %v1392
    %v1394 = vpop.f32.mrb[0].mxu0
    %v1395 = vpop.f32.mrb[0].mxu0
    %v1396 = vadd.f32 %v249, %v1395
    %v1397 = vpop.f32.mrb[0].mxu0
    %1398 = vmatprep.mubr.bf16.mxu0 0
    %1399 = vmatmul.mubr.bf16.gmra.mrb[0].mxu0 %v867
    %v1400 = vpop.f32.mrb[0].mxu0
    %v1401 = vadd.f32 %v249, %v1400
    %v1402 = vpop.f32.mrb[0].mxu0
    %v1403 = vpop.f32.mrb[0].mxu0
    %v1404 = vadd.f32 %v249, %v1403
    %v1405 = vpop.f32.mrb[0].mxu0
    %1406 = vmatprep.mubr.bf16.mxu0 0
    %1407 = vmatmul.mubr.bf16.gmra.mrb[0].mxu0 %v870
    %v1408 = vpop.f32.mrb[0].mxu0
    %v1409 = vadd.f32 %v249, %v1408
    %v1410 = vpop.f32.mrb[0].mxu0
    %v1411 = vpop.f32.mrb[0].mxu0
    %v1412 = vadd.f32 %v249, %v1411
    %v1413 = vpop.f32.mrb[0].mxu0
    %1414 = vmatprep.mubr.bf16.mxu0 0
    %1415 = vmatmul.mubr.bf16.gmra.mrb[0].mxu0 %v873
    %v1416 = vpop.f32.mrb[0].mxu0
    %v1417 = vadd.f32 %v249, %v1416
    %v1418 = vpop.f32.mrb[0].mxu0
    %v1419 = vpop.f32.mrb[0].mxu0
    %v1420 = vadd.f32 %v249, %v1419
    %v1421 = vpop.f32.mrb[0].mxu0
    %1422 = vmatprep.mubr.bf16.mxu0 0
    %1423 = vmatmul.mubr.bf16.gmra.mrb[0].mxu0 %v876
    %v1424 = vpop.f32.mrb[0].mxu0
    %v1425 = vadd.f32 %v249, %v1424
    %v1426 = vpop.f32.mrb[0].mxu0
    %v1427 = vpop.f32.mrb[0].mxu0
    %v1428 = vadd.f32 %v249, %v1427
    %v1429 = vpop.f32.mrb[0].mxu0
    %1430 = vmatprep.mubr.bf16.mxu0 0
    %1431 = vmatmul.mubr.bf16.gmra.mrb[0].mxu0 %v879
    %v1432 = vpop.f32.mrb[0].mxu0
    %v1433 = vadd.f32 %v249, %v1432
    %v1434 = vpop.f32.mrb[0].mxu0
    %v1435 = vpop.f32.mrb[0].mxu0
    %v1436 = vadd.f32 %v249, %v1435
    %v1437 = vpop.f32.mrb[0].mxu0
    %1438 = vmatprep.mubr.bf16.mxu0 0
    %1439 = vmatmul.mubr.bf16.gmra.mrb[0].mxu0 %v882
    %v1440 = vpop.f32.mrb[0].mxu0
    %v1441 = vadd.f32 %v249, %v1440
    %v1442 = vpop.f32.mrb[0].mxu0
    %v1443 = vpop.f32.mrb[0].mxu0
    %v1444 = vadd.f32 %v249, %v1443
    %v1445 = vpop.f32.mrb[0].mxu0
    %1446 = vmatprep.mubr.bf16.mxu0 0
    %1447 = vmatmul.mubr.bf16.gmra.mrb[0].mxu0 %v885
    %v1448 = vpop.f32.mrb[0].mxu0
    %v1449 = vadd.f32 %v249, %v1448
    %v1450 = vpop.f32.mrb[0].mxu0
    %v1451 = vpop.f32.mrb[0].mxu0
    %v1452 = vadd.f32 %v249, %v1451
    %v1453 = vpop.f32.mrb[0].mxu0
    %1454 = vmatprep.mubr.bf16.mxu0 0
    %1455 = vmatmul.mubr.bf16.gmra.mrb[0].mxu0 %v888
    %v1456 = vpop.f32.mrb[0].mxu0
    %v1457 = vadd.f32 %v249, %v1456
    %v1458 = vpop.f32.mrb[0].mxu0
    %v1459 = vpop.f32.mrb[0].mxu0
    %v1460 = vadd.f32 %v249, %v1459
    %v1461 = vpop.f32.mrb[0].mxu0
    %1462 = vmatprep.mubr.bf16.mxu0 0
    %1463 = vmatmul.mubr.bf16.gmra.mrb[0].mxu0 %v891
    %v1464 = vpop.f32.mrb[0].mxu0
    %v1465 = vadd.f32 %v249, %v1464
    %v1466 = vpop.f32.mrb[0].mxu0
    %v1467 = vpop.f32.mrb[0].mxu0
    %v1468 = vadd.f32 %v249, %v1467
    %v1469 = vpop.f32.mrb[0].mxu0
    %1470 = vmatprep.mubr.bf16.mxu0 0
    %1471 = vmatmul.mubr.bf16.gmra.mrb[0].mxu0 %v894
    %v1472 = vpop.f32.mrb[0].mxu0
    %v1473 = vadd.f32 %v249, %v1472
    %v1474 = vpop.f32.mrb[0].mxu0
    %v1475 = vpop.f32.mrb[0].mxu0
    %v1476 = vadd.f32 %v249, %v1475
    %v1477 = vpop.f32.mrb[0].mxu0
    %1478 = vmatprep.mubr.bf16.mxu0 0
    %1479 = vmatmul.mubr.bf16.gmra.mrb[0].mxu0 %v897
    %v1480 = vpop.f32.mrb[0].mxu0
    %v1481 = vadd.f32 %v249, %v1480
    %v1482 = vpop.f32.mrb[0].mxu0
    %v1483 = vpop.f32.mrb[0].mxu0
    %v1484 = vadd.f32 %v249, %v1483
    %v1485 = vpop.f32.mrb[0].mxu0
    %1486 = vmatprep.mubr.bf16.mxu0 0
    %1487 = vmatmul.mubr.bf16.gmra.mrb[0].mxu0 %v900
    %v1488 = vpop.f32.mrb[0].mxu0
    %v1489 = vadd.f32 %v249, %v1488
    %v1490 = vpop.f32.mrb[0].mxu0
    %v1491 = vpop.f32.mrb[0].mxu0
    %v1492 = vadd.f32 %v249, %v1491
    %v1493 = vpop.f32.mrb[0].mxu0
    %1494 = vmatprep.mubr.bf16.mxu0 0
    %1495 = vmatmul.mubr.bf16.gmra.mrb[0].mxu0 %v903
    %v1496 = vpop.f32.mrb[0].mxu0
    %v1497 = vadd.f32 %v249, %v1496
    %v1498 = vpop.f32.mrb[0].mxu0
    %v1499 = vpop.f32.mrb[0].mxu0
    %v1500 = vadd.f32 %v249, %v1499
    %v1501 = vpop.f32.mrb[0].mxu0
    %1502 = vmatprep.mubr.bf16.mxu0 0
    %1503 = vmatmul.mubr.bf16.gmra.mrb[0].mxu0 %v906
    %v1504 = vpop.f32.mrb[0].mxu0
    %v1505 = vadd.f32 %v249, %v1504
    %v1506 = vpop.f32.mrb[0].mxu0
    %v1507 = vpop.f32.mrb[0].mxu0
    %v1508 = vadd.f32 %v249, %v1507
    %v1509 = vpop.f32.mrb[0].mxu0
    %1510 = vmatprep.mubr.bf16.mxu0 0
    %1511 = vmatmul.mubr.bf16.gmra.mrb[0].mxu0 %v909
    %v1512 = vpop.f32.mrb[0].mxu0
    %v1513 = vadd.f32 %v249, %v1512
    %v1514 = vpop.f32.mrb[0].mxu0
    %v1515 = vpop.f32.mrb[0].mxu0
    %v1516 = vadd.f32 %v249, %v1515
    %v1517 = vpop.f32.mrb[0].mxu0
    %1518 = vmatprep.mubr.bf16.mxu0 0
    %1519 = vmatmul.mubr.bf16.gmra.mrb[0].mxu0 %v912
    %v1520 = vpop.f32.mrb[0].mxu0
    %v1521 = vadd.f32 %v249, %v1520
    %v1522 = vpop.f32.mrb[0].mxu0
    %v1523 = vpop.f32.mrb[0].mxu0
    %v1524 = vadd.f32 %v249, %v1523
    %v1525 = vpop.f32.mrb[0].mxu0
    %1526 = vmatprep.mubr.bf16.mxu0 0
    %1527 = vmatmul.mubr.bf16.gmra.mrb[0].mxu0 %v915
    %v1528 = vpop.f32.mrb[0].mxu0
    %v1529 = vadd.f32 %v249, %v1528
    %v1530 = vpop.f32.mrb[0].mxu0
    %v1531 = vpop.f32.mrb[0].mxu0
    %v1532 = vadd.f32 %v249, %v1531
    %v1533 = vpop.f32.mrb[0].mxu0
    %1534 = vmatprep.mubr.bf16.mxu0 0
    %1535 = vmatmul.mubr.bf16.gmra.mrb[0].mxu0 %v918
    %v1536 = vpop.f32.mrb[0].mxu0
    %v1537 = vadd.f32 %v249, %v1536
    %v1538 = vpop.f32.mrb[0].mxu0
    %v1539 = vpop.f32.mrb[0].mxu0
    %v1540 = vadd.f32 %v249, %v1539
    %v1541 = vpop.f32.mrb[0].mxu0
    %1542 = vmatprep.mubr.bf16.mxu0 0
    %1543 = vmatmul.mubr.bf16.gmra.mrb[0].mxu0 %v921
    %v1544 = vpop.f32.mrb[0].mxu0
    %v1545 = vadd.f32 %v249, %v1544
    %v1546 = vpop.f32.mrb[0].mxu0
    %v1547 = vpop.f32.mrb[0].mxu0
    %v1548 = vadd.f32 %v249, %v1547
    %v1549 = vpop.f32.mrb[0].mxu0
    %1550 = vmatprep.mubr.bf16.mxu0 0
    %1551 = vmatmul.mubr.bf16.gmra.mrb[0].mxu0 %v924
    %v1552 = vpop.f32.mrb[0].mxu0
    %v1553 = vadd.f32 %v249, %v1552
    %v1554 = vpop.f32.mrb[0].mxu0
    %v1555 = vpop.f32.mrb[0].mxu0
    %v1556 = vadd.f32 %v249, %v1555
    %v1557 = vpop.f32.mrb[0].mxu0
    %1558 = vmatprep.mubr.bf16.mxu0 0
    %1559 = vmatmul.mubr.bf16.gmra.mrb[0].mxu0 %v927
    %v1560 = vpop.f32.mrb[0].mxu0
    %v1561 = vadd.f32 %v249, %v1560
    %v1562 = vpop.f32.mrb[0].mxu0
    %v1563 = vpop.f32.mrb[0].mxu0
    %v1564 = vadd.f32 %v249, %v1563
    %v1565 = vpop.f32.mrb[0].mxu0
    %1566 = vmatprep.mubr.bf16.mxu0 0
    %1567 = vmatmul.mubr.bf16.gmra.mrb[0].mxu0 %v930
    %v1568 = vpop.f32.mrb[0].mxu0
    %v1569 = vadd.f32 %v249, %v1568
    %v1570 = vpop.f32.mrb[0].mxu0
    %v1571 = vpop.f32.mrb[0].mxu0
    %v1572 = vadd.f32 %v249, %v1571
    %v1573 = vpop.f32.mrb[0].mxu0
    %1574 = vmatprep.mubr.bf16.mxu0 0
    %1575 = vmatmul.mubr.bf16.gmra.mrb[0].mxu0 %v933
    %v1576 = vpop.f32.mrb[0].mxu0
    %v1577 = vadd.f32 %v249, %v1576
    %v1578 = vpop.f32.mrb[0].mxu0
    %v1579 = vpop.f32.mrb[0].mxu0
    %v1580 = vadd.f32 %v249, %v1579
    %v1581 = vpop.f32.mrb[0].mxu0
    %1582 = vmatprep.mubr.bf16.mxu0 0
    %1583 = vmatmul.mubr.bf16.gmra.mrb[0].mxu0 %v936
    %v1584 = vpop.f32.mrb[0].mxu0
    %v1585 = vadd.f32 %v249, %v1584
    %v1586 = vpop.f32.mrb[0].mxu0
    %v1587 = vpop.f32.mrb[0].mxu0
    %v1588 = vadd.f32 %v249, %v1587
    %v1589 = vpop.f32.mrb[0].mxu0
    %1590 = vmatprep.mubr.bf16.mxu0 0
    %1591 = vmatmul.mubr.bf16.gmra.mrb[0].mxu0 %v939
    %v1592 = vpop.f32.mrb[0].mxu0
    %v1593 = vadd.f32 %v249, %v1592
    %v1594 = vpop.f32.mrb[0].mxu0
    %v1595 = vpop.f32.mrb[0].mxu0
    %v1596 = vadd.f32 %v249, %v1595
    %v1597 = vpop.f32.mrb[0].mxu0
    %1598 = vmatprep.mubr.bf16.mxu0 0
    %1599 = vmatmul.mubr.bf16.gmra.mrb[0].mxu0 %v942
    %v1600 = vpop.f32.mrb[0].mxu0
    %v1601 = vadd.f32 %v249, %v1600
    %v1602 = vpop.f32.mrb[0].mxu0
    %v1603 = vpop.f32.mrb[0].mxu0
    %v1604 = vadd.f32 %v249, %v1603
    %v1605 = vpop.f32.mrb[0].mxu0
    %1606 = vmatprep.mubr.bf16.mxu0 0
    %1607 = vmatmul.mubr.bf16.gmra.mrb[0].mxu0 %v945
    %v1608 = vpop.f32.mrb[0].mxu0
    %v1609 = vadd.f32 %v249, %v1608
    %v1610 = vpop.f32.mrb[0].mxu0
    %v1611 = vpop.f32.mrb[0].mxu0
    %v1612 = vadd.f32 %v249, %v1611
    %v1613 = vpop.f32.mrb[0].mxu0
    %1614 = vmatprep.mubr.bf16.mxu0 0
    %1615 = vmatmul.mubr.bf16.gmra.mrb[0].mxu0 %v948
    %v1616 = vpop.f32.mrb[0].mxu0
    %v1617 = vadd.f32 %v249, %v1616
    %v1618 = vpop.f32.mrb[0].mxu0
    %v1619 = vpop.f32.mrb[0].mxu0
    %v1620 = vadd.f32 %v249, %v1619
    %v1621 = vpop.f32.mrb[0].mxu0
    %1622 = vmatprep.mubr.bf16.mxu0 0
    %1623 = vmatmul.mubr.bf16.gmra.mrb[0].mxu0 %v951
    %v1624 = vpop.f32.mrb[0].mxu0
    %v1625 = vadd.f32 %v249, %v1624
    %v1626 = vpop.f32.mrb[0].mxu0
    %v1627 = vpop.f32.mrb[0].mxu0
    %v1628 = vadd.f32 %v249, %v1627
    %v1629 = vpop.f32.mrb[0].mxu0
    %1630 = vmatprep.mubr.bf16.mxu0 0
    %1631 = vmatmul.mubr.bf16.gmra.mrb[0].mxu0 %v954
    %v1632 = vpop.f32.mrb[0].mxu0
    %v1633 = vadd.f32 %v249, %v1632
    %v1634 = vpop.f32.mrb[0].mxu0
    %v1635 = vpop.f32.mrb[0].mxu0
    %v1636 = vadd.f32 %v249, %v1635
    %v1637 = vpop.f32.mrb[0].mxu0
    %1638 = vmatprep.mubr.bf16.mxu0 0
    %1639 = vmatmul.mubr.bf16.gmra.mrb[0].mxu0 %v957
    %v1640 = vpop.f32.mrb[0].mxu0
    %v1641 = vadd.f32 %v249, %v1640
    %v1642 = vpop.f32.mrb[0].mxu0
    %v1643 = vpop.f32.mrb[0].mxu0
    %v1644 = vadd.f32 %v249, %v1643
    %v1645 = vpop.f32.mrb[0].mxu0
    %1646 = vmatprep.mubr.bf16.mxu0 0
    %1647 = vmatmul.mubr.bf16.gmra.mrb[0].mxu0 %v960
    %v1648 = vpop.f32.mrb[0].mxu0
    %v1649 = vadd.f32 %v249, %v1648
    %v1650 = vpop.f32.mrb[0].mxu0
    %v1651 = vpop.f32.mrb[0].mxu0
    %v1652 = vadd.f32 %v249, %v1651
    %v1653 = vpop.f32.mrb[0].mxu0
    %1654 = vmatprep.mubr.bf16.mxu0 0
    %1655 = vmatmul.mubr.bf16.gmra.mrb[0].mxu0 %v963
    %v1656 = vpop.f32.mrb[0].mxu0
    %v1657 = vadd.f32 %v249, %v1656
    %v1658 = vpop.f32.mrb[0].mxu0
    %v1659 = vpop.f32.mrb[0].mxu0
    %v1660 = vadd.f32 %v249, %v1659
    %v1661 = vpop.f32.mrb[0].mxu0
    %1662 = vmatprep.mubr.bf16.mxu0 0
    %1663 = vmatmul.mubr.bf16.gmra.mrb[0].mxu0 %v966
    %v1664 = vpop.f32.mrb[0].mxu0
    %v1665 = vadd.f32 %v249, %v1664
    %v1666 = vpop.f32.mrb[0].mxu0
    %v1667 = vpop.f32.mrb[0].mxu0
    %v1668 = vadd.f32 %v249, %v1667
    %v1669 = vpop.f32.mrb[0].mxu0
    %1670 = vmatprep.mubr.bf16.mxu0 0
    %1671 = vmatmul.mubr.bf16.gmra.mrb[0].mxu0 %v969
    %v1672 = vpop.f32.mrb[0].mxu0
    %v1673 = vadd.f32 %v249, %v1672
    %v1674 = vpop.f32.mrb[0].mxu0
    %v1675 = vpop.f32.mrb[0].mxu0
    %v1676 = vadd.f32 %v249, %v1675
    %v1677 = vpop.f32.mrb[0].mxu0
    %1678 = vmatprep.mubr.bf16.mxu0 0
    %1679 = vmatmul.mubr.bf16.gmra.mrb[0].mxu0 %v972
    %v1680 = vpop.f32.mrb[0].mxu0
    %v1681 = vadd.f32 %v249, %v1680
    %v1682 = vpop.f32.mrb[0].mxu0
    %v1683 = vpop.f32.mrb[0].mxu0
    %v1684 = vadd.f32 %v249, %v1683
    %v1685 = vpop.f32.mrb[0].mxu0
    %1686 = vmatprep.mubr.bf16.mxu0 0
    %1687 = vmatmul.mubr.bf16.gmra.mrb[0].mxu0 %v975
    %v1688 = vpop.f32.mrb[0].mxu0
    %v1689 = vadd.f32 %v249, %v1688
    %v1690 = vpop.f32.mrb[0].mxu0
    %v1691 = vpop.f32.mrb[0].mxu0
    %v1692 = vadd.f32 %v249, %v1691
    %v1693 = vpop.f32.mrb[0].mxu0
    %1694 = vmatprep.mubr.bf16.mxu0 0
    %1695 = vmatmul.mubr.bf16.gmra.mrb[0].mxu0 %v978
    %v1696 = vpop.f32.mrb[0].mxu0
    %v1697 = vadd.f32 %v249, %v1696
    %v1698 = vpop.f32.mrb[0].mxu0
    %v1699 = vpop.f32.mrb[0].mxu0
    %v1700 = vadd.f32 %v249, %v1699
    %v1701 = vpop.f32.mrb[0].mxu0
    %1702 = vmatprep.mubr.bf16.mxu0 0
    %1703 = vmatmul.mubr.bf16.gmra.mrb[0].mxu0 %v981
    %v1704 = vpop.f32.mrb[0].mxu0
    %v1705 = vadd.f32 %v249, %v1704
    %v1706 = vpop.f32.mrb[0].mxu0
    %v1707 = vpop.f32.mrb[0].mxu0
    %v1708 = vadd.f32 %v249, %v1707
    %v1709 = vpop.f32.mrb[0].mxu0
    %1710 = vmatprep.mubr.bf16.mxu0 0
    %1711 = vmatmul.mubr.bf16.gmra.mrb[0].mxu0 %v984
    %v1712 = vpop.f32.mrb[0].mxu0
    %v1713 = vadd.f32 %v249, %v1712
    %v1714 = vpop.f32.mrb[0].mxu0
    %v1715 = vpop.f32.mrb[0].mxu0
    %v1716 = vadd.f32 %v249, %v1715
    %v1717 = vpop.f32.mrb[0].mxu0
    %1718 = vmatprep.mubr.bf16.mxu0 0
    %1719 = vmatmul.mubr.bf16.gmra.mrb[0].mxu0 %v987
    %v1720 = vpop.f32.mrb[0].mxu0
    %v1721 = vadd.f32 %v249, %v1720
    %v1722 = vpop.f32.mrb[0].mxu0
    %v1723 = vpop.f32.mrb[0].mxu0
    %v1724 = vadd.f32 %v249, %v1723
    %v1725 = vpop.f32.mrb[0].mxu0
    %1726 = vmatprep.mubr.bf16.mxu0 0
    %1727 = vmatmul.mubr.bf16.gmra.mrb[0].mxu0 %v990
    %v1728 = vpop.f32.mrb[0].mxu0
    %v1729 = vadd.f32 %v249, %v1728
    %v1730 = vpop.f32.mrb[0].mxu0
    %v1731 = vpop.f32.mrb[0].mxu0
    %v1732 = vadd.f32 %v249, %v1731
    %v1733 = vpop.f32.mrb[0].mxu0
    %1734 = vmatprep.mubr.bf16.mxu0 0
    %1735 = vmatmul.mubr.bf16.gmra.mrb[0].mxu0 %v993
    %v1736 = vpop.f32.mrb[0].mxu0
    %v1737 = vadd.f32 %v249, %v1736
    %v1738 = vpop.f32.mrb[0].mxu0
    %v1739 = vpop.f32.mrb[0].mxu0
    %v1740 = vadd.f32 %v249, %v1739
    %v1741 = vpop.f32.mrb[0].mxu0
    %1742 = vmatprep.mubr.bf16.mxu0 0
    %1743 = vmatmul.mubr.bf16.gmra.mrb[0].mxu0 %v996
    %v1744 = vpop.f32.mrb[0].mxu0
    %v1745 = vadd.f32 %v249, %v1744
    %v1746 = vpop.f32.mrb[0].mxu0
    %v1747 = vpop.f32.mrb[0].mxu0
    %v1748 = vadd.f32 %v249, %v1747
    %v1749 = vpop.f32.mrb[0].mxu0
    %1750 = vmatprep.mubr.bf16.mxu0 0
    %1751 = vmatmul.mubr.bf16.gmra.mrb[0].mxu0 %v999
    %v1752 = vpop.f32.mrb[0].mxu0
    %v1753 = vadd.f32 %v249, %v1752
    %v1754 = vpop.f32.mrb[0].mxu0
    %v1755 = vpop.f32.mrb[0].mxu0
    %v1756 = vadd.f32 %v249, %v1755
    %v1757 = vpop.f32.mrb[0].mxu0
    %1758 = vmatprep.mubr.bf16.mxu0 0
    %1759 = vmatmul.mubr.bf16.gmra.mrb[0].mxu0 %v1002
    %v1760 = vpop.f32.mrb[0].mxu0
    %v1761 = vadd.f32 %v249, %v1760
    %v1762 = vpop.f32.mrb[0].mxu0
    %v1763 = vpop.f32.mrb[0].mxu0
    %v1764 = vadd.f32 %v249, %v1763
    %v1765 = vpop.f32.mrb[0].mxu0
    %1766 = vmatprep.mubr.bf16.mxu0 0
    %1767 = vmatmul.mubr.bf16.gmra.mrb[0].mxu0 %v1005
    %v1768 = vpop.f32.mrb[0].mxu0
    %v1769 = vadd.f32 %v249, %v1768
    %v1770 = vpop.f32.mrb[0].mxu0
    %v1771 = vpop.f32.mrb[0].mxu0
    %v1772 = vadd.f32 %v249, %v1771
    %v1773 = vpop.f32.mrb[0].mxu0
    %1774 = vmatprep.mubr.bf16.mxu0 0
    %1775 = vmatmul.mubr.bf16.gmra.mrb[0].mxu0 %v1008
    %v1776 = vpop.f32.mrb[0].mxu0
    %v1777 = vadd.f32 %v249, %v1776
    %v1778 = vpop.f32.mrb[0].mxu0
    %v1779 = vpop.f32.mrb[0].mxu0
    %v1780 = vadd.f32 %v249, %v1779
    %v1781 = vpop.f32.mrb[0].mxu0
    %1782 = vmatprep.mubr.bf16.mxu0 0
    %1783 = vmatmul.mubr.bf16.gmra.mrb[0].mxu0 %v1011
    %v1784 = vpop.f32.mrb[0].mxu0
    %v1785 = vadd.f32 %v249, %v1784
    %v1786 = vpop.f32.mrb[0].mxu0
    %v1787 = vpop.f32.mrb[0].mxu0
    %v1788 = vadd.f32 %v249, %v1787
    %v1789 = vpop.f32.mrb[0].mxu0
    %1790 = vmatprep.mubr.bf16.mxu0 0
    %1791 = vmatmul.mubr.bf16.gmra.mrb[0].mxu0 %v1014
    %v1792 = vpop.f32.mrb[0].mxu0
    %v1793 = vadd.f32 %v249, %v1792
    %v1794 = vpop.f32.mrb[0].mxu0
    %v1795 = vpop.f32.mrb[0].mxu0
    %v1796 = vadd.f32 %v249, %v1795
    %v1797 = vpop.f32.mrb[0].mxu0
    %1798 = vmatprep.mubr.bf16.mxu0 0
    %1799 = vmatmul.mubr.bf16.gmra.mrb[0].mxu0 %v1017
    %v1800 = vpop.f32.mrb[0].mxu0
    %v1801 = vadd.f32 %v249, %v1800
    %v1802 = vpop.f32.mrb[0].mxu0
    %v1803 = vpop.f32.mrb[0].mxu0
    %v1804 = vadd.f32 %v249, %v1803
    %v1805 = vpop.f32.mrb[0].mxu0
    %1806 = vmatprep.mubr.bf16.mxu0 0
    %1807 = vmatmul.mubr.bf16.gmra.mrb[0].mxu0 %v1020
    %v1808 = vpop.f32.mrb[0].mxu0
    %v1809 = vadd.f32 %v249, %v1808
    %v1810 = vpop.f32.mrb[0].mxu0
    %v1811 = vpop.f32.mrb[0].mxu0
    %v1812 = vadd.f32 %v249, %v1811
    %v1813 = vpop.f32.mrb[0].mxu0
    %1814 = vmatprep.mubr.bf16.mxu0 0
    %1815 = vmatmul.mubr.bf16.gmra.mrb[0].mxu0 %v1023
    %v1816 = vpop.f32.mrb[0].mxu0
    %v1817 = vadd.f32 %v249, %v1816
    %v1818 = vpop.f32.mrb[0].mxu0
    %v1819 = vpop.f32.mrb[0].mxu0
    %v1820 = vadd.f32 %v249, %v1819
    %v1821 = vpop.f32.mrb[0].mxu0
    %1822 = vmatprep.mubr.bf16.mxu0 0
    %1823 = vmatmul.mubr.bf16.gmra.mrb[0].mxu0 %v1026
    %v1824 = vpop.f32.mrb[0].mxu0
    %v1825 = vadd.f32 %v249, %v1824
    %v1826 = vpop.f32.mrb[0].mxu0
    %v1827 = vpop.f32.mrb[0].mxu0
    %v1828 = vadd.f32 %v249, %v1827
    %v1829 = vpop.f32.mrb[0].mxu0
    %1830 = vmatprep.mubr.bf16.mxu0 0
    %1831 = vmatmul.mubr.bf16.gmra.mrb[0].mxu0 %v1029
    %v1832 = vpop.f32.mrb[0].mxu0
    %v1833 = vadd.f32 %v249, %v1832
    %v1834 = vpop.f32.mrb[0].mxu0
    %v1835 = vpop.f32.mrb[0].mxu0
    %v1836 = vadd.f32 %v249, %v1835
    %v1837 = vpop.f32.mrb[0].mxu0
    %1838 = vdwg.mxu0
    %v1839 = vmax.f32 %v1073, 0.0
    %v1840 = vmax.f32 %v1076, 0.0
    %v1841 = vmax.f32 %v1081, 0.0
    %v1842 = vmax.f32 %v1084, 0.0
    %v1843 = vmax.f32 %v1089, 0.0
    %v1844 = vmax.f32 %v1092, 0.0
    %v1845 = vmax.f32 %v1097, 0.0
    %v1846 = vmax.f32 %v1100, 0.0
    %v1847 = vmax.f32 %v1105, 0.0
    %v1848 = vmax.f32 %v1108, 0.0
    %v1849 = vmax.f32 %v1113, 0.0
    %v1850 = vmax.f32 %v1116, 0.0
    %v1851 = vmax.f32 %v1121, 0.0
    %v1852 = vmax.f32 %v1124, 0.0
    %v1853 = vmax.f32 %v1129, 0.0
    %v1854 = vmax.f32 %v1132, 0.0
    %v1855 = vmax.f32 %v1137, 0.0
    %v1856 = vmax.f32 %v1140, 0.0
    %v1857 = vmax.f32 %v1145, 0.0
    %v1858 = vmax.f32 %v1148, 0.0
    %v1859 = vmax.f32 %v1153, 0.0
    %v1860 = vmax.f32 %v1156, 0.0
    %v1861 = vmax.f32 %v1161, 0.0
    %v1862 = vmax.f32 %v1164, 0.0
    %v1863 = vmax.f32 %v1169, 0.0
    %v1864 = vmax.f32 %v1172, 0.0
    %v1865 = vmax.f32 %v1177, 0.0
    %v1866 = vmax.f32 %v1180, 0.0
    %v1867 = vmax.f32 %v1185, 0.0
    %v1868 = vmax.f32 %v1188, 0.0
    %v1869 = vmax.f32 %v1193, 0.0
    %v1870 = vmax.f32 %v1196, 0.0
    %v1871 = vmax.f32 %v1201, 0.0
    %v1872 = vmax.f32 %v1204, 0.0
    %v1873 = vmax.f32 %v1209, 0.0
    %v1874 = vmax.f32 %v1212, 0.0
    %v1875 = vmax.f32 %v1217, 0.0
    %v1876 = vmax.f32 %v1220, 0.0
    %v1877 = vmax.f32 %v1225, 0.0
    %v1878 = vmax.f32 %v1228, 0.0
    %v1879 = vmax.f32 %v1233, 0.0
    %v1880 = vmax.f32 %v1236, 0.0
    %v1881 = vmax.f32 %v1241, 0.0
    %v1882 = vmax.f32 %v1244, 0.0
    %v1883 = vmax.f32 %v1249, 0.0
    %v1884 = vmax.f32 %v1252, 0.0
    %v1885 = vmax.f32 %v1257, 0.0
    %v1886 = vmax.f32 %v1260, 0.0
    %v1887 = vmax.f32 %v1265, 0.0
    %v1888 = vmax.f32 %v1268, 0.0
    %v1889 = vmax.f32 %v1273, 0.0
    %v1890 = vmax.f32 %v1276, 0.0
    %v1891 = vmax.f32 %v1281, 0.0
    %v1892 = vmax.f32 %v1284, 0.0
    %v1893 = vmax.f32 %v1289, 0.0
    %v1894 = vmax.f32 %v1292, 0.0
    %v1895 = vmax.f32 %v1297, 0.0
    %v1896 = vmax.f32 %v1300, 0.0
    %v1897 = vmax.f32 %v1305, 0.0
    %v1898 = vmax.f32 %v1308, 0.0
    %v1899 = vmax.f32 %v1313, 0.0
    %v1900 = vmax.f32 %v1316, 0.0
    %v1901 = vmax.f32 %v1321, 0.0
    %v1902 = vmax.f32 %v1324, 0.0
    %v1903 = vmax.f32 %v1329, 0.0
    %v1904 = vmax.f32 %v1332, 0.0
    %v1905 = vmax.f32 %v1337, 0.0
    %v1906 = vmax.f32 %v1340, 0.0
    %v1907 = vmax.f32 %v1345, 0.0
    %v1908 = vmax.f32 %v1348, 0.0
    %v1909 = vmax.f32 %v1353, 0.0
    %v1910 = vmax.f32 %v1356, 0.0
    %v1911 = vmax.f32 %v1361, 0.0
    %v1912 = vmax.f32 %v1364, 0.0
    %v1913 = vmax.f32 %v1369, 0.0
    %v1914 = vmax.f32 %v1372, 0.0
    %v1915 = vmax.f32 %v1377, 0.0
    %v1916 = vmax.f32 %v1380, 0.0
    %v1917 = vmax.f32 %v1385, 0.0
    %v1918 = vmax.f32 %v1388, 0.0
    %v1919 = vmax.f32 %v1393, 0.0
    %v1920 = vmax.f32 %v1396, 0.0
    %v1921 = vmax.f32 %v1401, 0.0
    %v1922 = vmax.f32 %v1404, 0.0
    %v1923 = vmax.f32 %v1409, 0.0
    %v1924 = vmax.f32 %v1412, 0.0
    %v1925 = vmax.f32 %v1417, 0.0
    %v1926 = vmax.f32 %v1420, 0.0
    %v1927 = vmax.f32 %v1425, 0.0
    %v1928 = vmax.f32 %v1428, 0.0
    %v1929 = vmax.f32 %v1433, 0.0
    %v1930 = vmax.f32 %v1436, 0.0
    %v1931 = vmax.f32 %v1441, 0.0
    %v1932 = vmax.f32 %v1444, 0.0
    %v1933 = vmax.f32 %v1449, 0.0
    %v1934 = vmax.f32 %v1452, 0.0
    %v1935 = vmax.f32 %v1457, 0.0
    %v1936 = vmax.f32 %v1460, 0.0
    %v1937 = vmax.f32 %v1465, 0.0
    %v1938 = vmax.f32 %v1468, 0.0
    %v1939 = vmax.f32 %v1473, 0.0
    %v1940 = vmax.f32 %v1476, 0.0
    %v1941 = vmax.f32 %v1481, 0.0
    %v1942 = vmax.f32 %v1484, 0.0
    %v1943 = vmax.f32 %v1489, 0.0
    %v1944 = vmax.f32 %v1492, 0.0
    %v1945 = vmax.f32 %v1497, 0.0
    %v1946 = vmax.f32 %v1500, 0.0
    %v1947 = vmax.f32 %v1505, 0.0
    %v1948 = vmax.f32 %v1508, 0.0
    %v1949 = vmax.f32 %v1513, 0.0
    %v1950 = vmax.f32 %v1516, 0.0
    %v1951 = vmax.f32 %v1521, 0.0
    %v1952 = vmax.f32 %v1524, 0.0
    %v1953 = vmax.f32 %v1529, 0.0
    %v1954 = vmax.f32 %v1532, 0.0
    %v1955 = vmax.f32 %v1537, 0.0
    %v1956 = vmax.f32 %v1540, 0.0
    %v1957 = vmax.f32 %v1545, 0.0
    %v1958 = vmax.f32 %v1548, 0.0
    %v1959 = vmax.f32 %v1553, 0.0
    %v1960 = vmax.f32 %v1556, 0.0
    %v1961 = vmax.f32 %v1561, 0.0
    %v1962 = vmax.f32 %v1564, 0.0
    %v1963 = vmax.f32 %v1569, 0.0
    %v1964 = vmax.f32 %v1572, 0.0
    %v1965 = vmax.f32 %v1577, 0.0
    %v1966 = vmax.f32 %v1580, 0.0
    %v1967 = vmax.f32 %v1585, 0.0
    %v1968 = vmax.f32 %v1588, 0.0
    %v1969 = vmax.f32 %v1593, 0.0
    %v1970 = vmax.f32 %v1596, 0.0
    %v1971 = vmax.f32 %v1601, 0.0
    %v1972 = vmax.f32 %v1604, 0.0
    %v1973 = vmax.f32 %v1609, 0.0
    %v1974 = vmax.f32 %v1612, 0.0
    %v1975 = vmax.f32 %v1617, 0.0
    %v1976 = vmax.f32 %v1620, 0.0
    %v1977 = vmax.f32 %v1625, 0.0
    %v1978 = vmax.f32 %v1628, 0.0
    %v1979 = vmax.f32 %v1633, 0.0
    %v1980 = vmax.f32 %v1636, 0.0
    %v1981 = vmax.f32 %v1641, 0.0
    %v1982 = vmax.f32 %v1644, 0.0
    %v1983 = vmax.f32 %v1649, 0.0
    %v1984 = vmax.f32 %v1652, 0.0
    %v1985 = vmax.f32 %v1657, 0.0
    %v1986 = vmax.f32 %v1660, 0.0
    %v1987 = vmax.f32 %v1665, 0.0
    %v1988 = vmax.f32 %v1668, 0.0
    %v1989 = vmax.f32 %v1673, 0.0
    %v1990 = vmax.f32 %v1676, 0.0
    %v1991 = vmax.f32 %v1681, 0.0
    %v1992 = vmax.f32 %v1684, 0.0
    %v1993 = vmax.f32 %v1689, 0.0
    %v1994 = vmax.f32 %v1692, 0.0
    %v1995 = vmax.f32 %v1697, 0.0
    %v1996 = vmax.f32 %v1700, 0.0
    %v1997 = vmax.f32 %v1705, 0.0
    %v1998 = vmax.f32 %v1708, 0.0
    %v1999 = vmax.f32 %v1713, 0.0
    %v2000 = vmax.f32 %v1716, 0.0
    %v2001 = vmax.f32 %v1721, 0.0
    %v2002 = vmax.f32 %v1724, 0.0
    %v2003 = vmax.f32 %v1729, 0.0
    %v2004 = vmax.f32 %v1732, 0.0
    %v2005 = vmax.f32 %v1737, 0.0
    %v2006 = vmax.f32 %v1740, 0.0
    %v2007 = vmax.f32 %v1745, 0.0
    %v2008 = vmax.f32 %v1748, 0.0
    %v2009 = vmax.f32 %v1753, 0.0
    %v2010 = vmax.f32 %v1756, 0.0
    %v2011 = vmax.f32 %v1761, 0.0
    %v2012 = vmax.f32 %v1764, 0.0
    %v2013 = vmax.f32 %v1769, 0.0
    %v2014 = vmax.f32 %v1772, 0.0
    %v2015 = vmax.f32 %v1777, 0.0
    %v2016 = vmax.f32 %v1780, 0.0
    %v2017 = vmax.f32 %v1785, 0.0
    %v2018 = vmax.f32 %v1788, 0.0
    %v2019 = vmax.f32 %v1793, 0.0
    %v2020 = vmax.f32 %v1796, 0.0
    %v2021 = vmax.f32 %v1801, 0.0
    %v2022 = vmax.f32 %v1804, 0.0
    %v2023 = vmax.f32 %v1809, 0.0
    %v2024 = vmax.f32 %v1812, 0.0
    %v2025 = vmax.f32 %v1817, 0.0
    %v2026 = vmax.f32 %v1820, 0.0
    %v2027 = vmax.f32 %v1825, 0.0
    %v2028 = vmax.f32 %v1828, 0.0
    %v2029 = vmax.f32 %v1833, 0.0
    %v2030 = vmax.f32 %v1836, 0.0
    %v2031 = vadd.f32 %v1839, %v1840
    %v2032 = vadd.f32 %v2031, %v1841
    %v2033 = vadd.f32 %v2032, %v1842
    %v2034 = vadd.f32 %v2033, %v1843
    %v2035 = vadd.f32 %v2034, %v1844
    %v2036 = vadd.f32 %v2035, %v1845
    %v2037 = vadd.f32 %v2036, %v1846
    %v2038 = vadd.f32 %v2037, %v1847
    %v2039 = vadd.f32 %v2038, %v1848
    %v2040 = vadd.f32 %v2039, %v1849
    %v2041 = vadd.f32 %v2040, %v1850
    %v2042 = vadd.f32 %v2041, %v1851
    %v2043 = vadd.f32 %v2042, %v1852
    %v2044 = vadd.f32 %v2043, %v1853
    %v2045 = vadd.f32 %v2044, %v1854
    %v2046 = vadd.f32 %v2045, %v1855
    %v2047 = vadd.f32 %v2046, %v1856
    %v2048 = vadd.f32 %v2047, %v1857
    %v2049 = vadd.f32 %v2048, %v1858
    %v2050 = vadd.f32 %v2049, %v1859
    %v2051 = vadd.f32 %v2050, %v1860
    %v2052 = vadd.f32 %v2051, %v1861
    %v2053 = vadd.f32 %v2052, %v1862
    %v2054 = vadd.f32 %v2053, %v1863
    %v2055 = vadd.f32 %v2054, %v1864
    %v2056 = vadd.f32 %v2055, %v1865
    %v2057 = vadd.f32 %v2056, %v1866
    %v2058 = vadd.f32 %v2057, %v1867
    %v2059 = vadd.f32 %v2058, %v1868
    %v2060 = vadd.f32 %v2059, %v1869
    %v2061 = vadd.f32 %v2060, %v1870
    %v2062 = vrot.slane %v2061, 4
    %v2063 = vadd.f32 %v2061, %v2062
    %v2064 = vrot.slane %v2063, 2
    %v2065 = vadd.f32 %v2063, %v2064
    %v2066 = vrot.slane %v2065, 1
    %v2067 = vadd.f32 %v2065, %v2066
    %v2068 = vadd.f32 %v1871, %v1872
    %v2069 = vadd.f32 %v2068, %v1873
    %v2070 = vadd.f32 %v2069, %v1874
    %v2071 = vadd.f32 %v2070, %v1875
    %v2072 = vadd.f32 %v2071, %v1876
    %v2073 = vadd.f32 %v2072, %v1877
    %v2074 = vadd.f32 %v2073, %v1878
    %v2075 = vadd.f32 %v2074, %v1879
    %v2076 = vadd.f32 %v2075, %v1880
    %v2077 = vadd.f32 %v2076, %v1881
    %v2078 = vadd.f32 %v2077, %v1882
    %v2079 = vadd.f32 %v2078, %v1883
    %v2080 = vadd.f32 %v2079, %v1884
    %v2081 = vadd.f32 %v2080, %v1885
    %v2082 = vadd.f32 %v2081, %v1886
    %v2083 = vadd.f32 %v2082, %v1887
    %v2084 = vadd.f32 %v2083, %v1888
    %v2085 = vadd.f32 %v2084, %v1889
    %v2086 = vadd.f32 %v2085, %v1890
    %v2087 = vadd.f32 %v2086, %v1891
    %v2088 = vadd.f32 %v2087, %v1892
    %v2089 = vadd.f32 %v2088, %v1893
    %v2090 = vadd.f32 %v2089, %v1894
    %v2091 = vadd.f32 %v2090, %v1895
    %v2092 = vadd.f32 %v2091, %v1896
    %v2093 = vadd.f32 %v2092, %v1897
    %v2094 = vadd.f32 %v2093, %v1898
    %v2095 = vadd.f32 %v2094, %v1899
    %v2096 = vadd.f32 %v2095, %v1900
    %v2097 = vadd.f32 %v2096, %v1901
    %v2098 = vadd.f32 %v2097, %v1902
    %v2099 = vrot.slane %v2098, 4
    %v2100 = vadd.f32 %v2098, %v2099
    %v2101 = vrot.slane %v2100, 2
    %v2102 = vadd.f32 %v2100, %v2101
    %v2103 = vrot.slane %v2102, 1
    %v2104 = vadd.f32 %v2102, %v2103
    %v2105 = vadd.f32 %v1903, %v1904
    %v2106 = vadd.f32 %v2105, %v1905
    %v2107 = vadd.f32 %v2106, %v1906
    %v2108 = vadd.f32 %v2107, %v1907
    %v2109 = vadd.f32 %v2108, %v1908
    %v2110 = vadd.f32 %v2109, %v1909
    %v2111 = vadd.f32 %v2110, %v1910
    %v2112 = vadd.f32 %v2111, %v1911
    %v2113 = vadd.f32 %v2112, %v1912
    %v2114 = vadd.f32 %v2113, %v1913
    %v2115 = vadd.f32 %v2114, %v1914
    %v2116 = vadd.f32 %v2115, %v1915
    %v2117 = vadd.f32 %v2116, %v1916
    %v2118 = vadd.f32 %v2117, %v1917
    %v2119 = vadd.f32 %v2118, %v1918
    %v2120 = vadd.f32 %v2119, %v1919
    %v2121 = vadd.f32 %v2120, %v1920
    %v2122 = vadd.f32 %v2121, %v1921
    %v2123 = vadd.f32 %v2122, %v1922
    %v2124 = vadd.f32 %v2123, %v1923
    %v2125 = vadd.f32 %v2124, %v1924
    %v2126 = vadd.f32 %v2125, %v1925
    %v2127 = vadd.f32 %v2126, %v1926
    %v2128 = vadd.f32 %v2127, %v1927
    %v2129 = vadd.f32 %v2128, %v1928
    %v2130 = vadd.f32 %v2129, %v1929
    %v2131 = vadd.f32 %v2130, %v1930
    %v2132 = vadd.f32 %v2131, %v1931
    %v2133 = vadd.f32 %v2132, %v1932
    %v2134 = vadd.f32 %v2133, %v1933
    %v2135 = vadd.f32 %v2134, %v1934
    %v2136 = vrot.slane %v2135, 4
    %v2137 = vadd.f32 %v2135, %v2136
    %v2138 = vrot.slane %v2137, 2
    %v2139 = vadd.f32 %v2137, %v2138
    %v2140 = vrot.slane %v2139, 1
    %v2141 = vadd.f32 %v2139, %v2140
    %v2142 = vadd.f32 %v1935, %v1936
    %v2143 = vadd.f32 %v2142, %v1937
    %v2144 = vadd.f32 %v2143, %v1938
    %v2145 = vadd.f32 %v2144, %v1939
    %v2146 = vadd.f32 %v2145, %v1940
    %v2147 = vadd.f32 %v2146, %v1941
    %v2148 = vadd.f32 %v2147, %v1942
    %v2149 = vadd.f32 %v2148, %v1943
    %v2150 = vadd.f32 %v2149, %v1944
    %v2151 = vadd.f32 %v2150, %v1945
    %v2152 = vadd.f32 %v2151, %v1946
    %v2153 = vadd.f32 %v2152, %v1947
    %v2154 = vadd.f32 %v2153, %v1948
    %v2155 = vadd.f32 %v2154, %v1949
    %v2156 = vadd.f32 %v2155, %v1950
    %v2157 = vadd.f32 %v2156, %v1951
    %v2158 = vadd.f32 %v2157, %v1952
    %v2159 = vadd.f32 %v2158, %v1953
    %v2160 = vadd.f32 %v2159, %v1954
    %v2161 = vadd.f32 %v2160, %v1955
    %v2162 = vadd.f32 %v2161, %v1956
    %v2163 = vadd.f32 %v2162, %v1957
    %v2164 = vadd.f32 %v2163, %v1958
    %v2165 = vadd.f32 %v2164, %v1959
    %v2166 = vadd.f32 %v2165, %v1960
    %v2167 = vadd.f32 %v2166, %v1961
    %v2168 = vadd.f32 %v2167, %v1962
    %v2169 = vadd.f32 %v2168, %v1963
    %v2170 = vadd.f32 %v2169, %v1964
    %v2171 = vadd.f32 %v2170, %v1965
    %v2172 = vadd.f32 %v2171, %v1966
    %v2173 = vrot.slane %v2172, 4
    %v2174 = vadd.f32 %v2172, %v2173
    %v2175 = vrot.slane %v2174, 2
    %v2176 = vadd.f32 %v2174, %v2175
    %v2177 = vrot.slane %v2176, 1
    %v2178 = vadd.f32 %v2176, %v2177
    %v2179 = vadd.f32 %v1967, %v1968
    %v2180 = vadd.f32 %v2179, %v1969
    %v2181 = vadd.f32 %v2180, %v1970
    %v2182 = vadd.f32 %v2181, %v1971
    %v2183 = vadd.f32 %v2182, %v1972
    %v2184 = vadd.f32 %v2183, %v1973
    %v2185 = vadd.f32 %v2184, %v1974
    %v2186 = vadd.f32 %v2185, %v1975
    %v2187 = vadd.f32 %v2186, %v1976
    %v2188 = vadd.f32 %v2187, %v1977
    %v2189 = vadd.f32 %v2188, %v1978
    %v2190 = vadd.f32 %v2189, %v1979
    %v2191 = vadd.f32 %v2190, %v1980
    %v2192 = vadd.f32 %v2191, %v1981
    %v2193 = vadd.f32 %v2192, %v1982
    %v2194 = vadd.f32 %v2193, %v1983
    %v2195 = vadd.f32 %v2194, %v1984
    %v2196 = vadd.f32 %v2195, %v1985
    %v2197 = vadd.f32 %v2196, %v1986
    %v2198 = vadd.f32 %v2197, %v1987
    %v2199 = vadd.f32 %v2198, %v1988
    %v2200 = vadd.f32 %v2199, %v1989
    %v2201 = vadd.f32 %v2200, %v1990
    %v2202 = vadd.f32 %v2201, %v1991
    %v2203 = vadd.f32 %v2202, %v1992
    %v2204 = vadd.f32 %v2203, %v1993
    %v2205 = vadd.f32 %v2204, %v1994
    %v2206 = vadd.f32 %v2205, %v1995
    %v2207 = vadd.f32 %v2206, %v1996
    %v2208 = vadd.f32 %v2207, %v1997
    %v2209 = vadd.f32 %v2208, %v1998
    %v2210 = vrot.slane %v2209, 4
    %v2211 = vadd.f32 %v2209, %v2210
    %v2212 = vrot.slane %v2211, 2
    %v2213 = vadd.f32 %v2211, %v2212
    %v2214 = vrot.slane %v2213, 1
    %v2215 = vadd.f32 %v2213, %v2214
    %v2216 = vadd.f32 %v1999, %v2000
    %v2217 = vadd.f32 %v2216, %v2001
    %v2218 = vadd.f32 %v2217, %v2002
    %v2219 = vadd.f32 %v2218, %v2003
    %v2220 = vadd.f32 %v2219, %v2004
    %v2221 = vadd.f32 %v2220, %v2005
    %v2222 = vadd.f32 %v2221, %v2006
    %v2223 = vadd.f32 %v2222, %v2007
    %v2224 = vadd.f32 %v2223, %v2008
    %v2225 = vadd.f32 %v2224, %v2009
    %v2226 = vadd.f32 %v2225, %v2010
    %v2227 = vadd.f32 %v2226, %v2011
    %v2228 = vadd.f32 %v2227, %v2012
    %v2229 = vadd.f32 %v2228, %v2013
    %v2230 = vadd.f32 %v2229, %v2014
    %v2231 = vadd.f32 %v2230, %v2015
    %v2232 = vadd.f32 %v2231, %v2016
    %v2233 = vadd.f32 %v2232, %v2017
    %v2234 = vadd.f32 %v2233, %v2018
    %v2235 = vadd.f32 %v2234, %v2019
    %v2236 = vadd.f32 %v2235, %v2020
    %v2237 = vadd.f32 %v2236, %v2021
    %v2238 = vadd.f32 %v2237, %v2022
    %v2239 = vadd.f32 %v2238, %v2023
    %v2240 = vadd.f32 %v2239, %v2024
    %v2241 = vadd.f32 %v2240, %v2025
    %v2242 = vadd.f32 %v2241, %v2026
    %v2243 = vadd.f32 %v2242, %v2027
    %v2244 = vadd.f32 %v2243, %v2028
    %v2245 = vadd.f32 %v2244, %v2029
    %v2246 = vadd.f32 %v2245, %v2030
    %v2247 = vrot.slane %v2246, 4
    %v2248 = vadd.f32 %v2246, %v2247
    %v2249 = vrot.slane %v2248, 2
    %v2250 = vadd.f32 %v2248, %v2249
    %v2251 = vrot.slane %v2250, 1
    %v2252 = vadd.f32 %v2250, %v2251
    %v2253 = vrcp.pop 256.0
    %v2254 = vmul.f32 %v2067, %v2253
    %v2255 = vmul.f32 %v2104, %v2253
    %v2256 = vmul.f32 %v2141, %v2253
    %v2257 = vmul.f32 %v2178, %v2253
    %v2258 = vmul.f32 %v2215, %v2253
    %v2259 = vmul.f32 %v2252, %v2253
    %s2260 = sld [smem:[#allocation3]]
    %s2261 = scalar_lea.vmem %s4, %s2260
    %v2262 = vld [vmem:[%s2261] sm:$0x1]
    %v2263 = vld [vmem:[%s5] sm:$0xff]
    %v2264 = vld [vmem:[%s5 + $0x8] sm:$0xff]
    %v2265 = vld [vmem:[%s5 + $0x10] sm:$0xff]
    %v2266 = vld [vmem:[%s5 + $0x18] sm:$0xff]
    %v2267 = vld [vmem:[%s5 + $0x20] sm:$0xff]
    %v2268 = vld [vmem:[%s5 + $0x28] sm:$0xff]
    %v2269 = vld [vmem:[%s5 + $0x30] sm:$0xff]
    %v2270 = vld [vmem:[%s5 + $0x38] sm:$0xff]
    %v2271 = vld [vmem:[%s5 + $0x40] sm:$0xff]
    %v2272 = vld [vmem:[%s5 + $0x48] sm:$0xff]
    %v2273 = vld [vmem:[%s5 + $0x50] sm:$0xff]
    %v2274 = vld [vmem:[%s5 + $0x58] sm:$0xff]
    %v2275 = vld [vmem:[%s5 + $0x60] sm:$0xff]
    %v2276 = vld [vmem:[%s5 + $0x68] sm:$0xff]
    %v2277 = vld [vmem:[%s5 + $0x70] sm:$0xff]
    %v2278 = vld [vmem:[%s5 + $0x78] sm:$0xff]
    %v2279 = vld [vmem:[%s6] sm:$0x1]
    %v2281 = vlaneseq
    %v2282 = vshrl.u32 %v2281, 7
    %v2283 = vsub.s32 0, %v2282
    %v2284 = vrot.slane %v2279, %v2283
    %vm2290 = vcmask 1041409
    %v2291 = vsel %vm2290, %v2257, %v2256
    %vm2292 = vcmask 1042434
    %v2293 = vsel %vm2292, %v2258, %v2291
    %vm2294 = vcmask 1043459
    %v2295 = vsel %vm2294, %v2259, %v2293
    %2297 = vmatprep.subr.mxu0 0.0
    %2298 = vmatpush1.msra.mxu0 %v2263
    %2299 = vmatprep.subr.mxu0 0.0
    %2300 = vmatpush1.msra.mxu0 %v2264
    %2301 = vmatprep.subr.mxu0 0.0
    %2302 = vmatpush1.msra.mxu0 %v2265
    %2303 = vmatprep.subr.mxu0 0.0
    %2304 = vmatpush1.msra.mxu0 %v2266
    %2305 = vmatprep.subr.mxu0 0.0
    %2306 = vmatpush1.msra.mxu0 %v2267
    %2307 = vmatprep.subr.mxu0 0.0
    %2308 = vmatpush1.msra.mxu0 %v2268
    %2309 = vmatprep.subr.mxu0 0.0
    %2310 = vmatpush1.msra.mxu0 %v2269
    %2311 = vmatprep.subr.mxu0 0.0
    %2312 = vmatpush1.msra.mxu0 %v2270
    %2313 = vmatprep.subr.mxu0 0.0
    %2314 = vmatpush1.msra.mxu0 %v2271
    %2315 = vmatprep.subr.mxu0 0.0
    %2316 = vmatpush1.msra.mxu0 %v2272
    %2317 = vmatprep.subr.mxu0 0.0
    %2318 = vmatpush1.msra.mxu0 %v2273
    %2319 = vmatprep.subr.mxu0 0.0
    %2320 = vmatpush1.msra.mxu0 %v2274
    %2321 = vmatprep.subr.mxu0 0.0
    %2322 = vmatpush1.msra.mxu0 %v2275
    %2323 = vmatprep.subr.mxu0 0.0
    %2324 = vmatpush1.msra.mxu0 %v2276
    %2325 = vmatprep.subr.mxu0 0.0
    %2326 = vmatpush1.msra.mxu0 %v2277
    %2327 = vmatprep.subr.mxu0 0.0
    %2328 = vmatpush1.msra.mxu0 %v2278
    %2329 = vmatprep.subr.mxu0 0.0
    %2330 = vmatpush1.msra.mxu0 0.0
    %2331 = vmatprep.subr.mxu0 0.0
    %2332 = vmatpush1.msra.mxu0 0.0
    %2333 = vmatprep.subr.mxu0 0.0
    %2334 = vmatpush1.msra.mxu0 0.0
    %2335 = vmatprep.subr.mxu0 0.0
    %2336 = vmatpush1.msra.mxu0 0.0
    %2337 = vmatprep.subr.mxu0 0.0
    %2338 = vmatpush1.msra.mxu0 0.0
    %2339 = vmatprep.subr.mxu0 0.0
    %2340 = vmatpush1.msra.mxu0 0.0
    %2341 = vmatprep.subr.mxu0 0.0
    %2342 = vmatpush1.msra.mxu0 0.0
    %2343 = vmatprep.subr.mxu0 0.0
    %2344 = vmatpush1.msra.mxu0 0.0
    %2345 = vmatprep.subr.mxu0 0.0
    %2346 = vmatpush1.msra.mxu0 0.0
    %2347 = vmatprep.subr.mxu0 0.0
    %2348 = vmatpush1.msra.mxu0 0.0
    %2349 = vmatprep.subr.mxu0 0.0
    %2350 = vmatpush1.msra.mxu0 0.0
    %2351 = vmatprep.subr.mxu0 0.0
    %2352 = vmatpush1.msra.mxu0 0.0
    %2353 = vmatprep.subr.mxu0 0.0
    %2354 = vmatpush1.msra.mxu0 0.0
    %2355 = vmatprep.subr.mxu0 0.0
    %2356 = vmatpush1.msra.mxu0 0.0
    %2357 = vmatprep.subr.mxu0 0.0
    %2358 = vmatpush1.msra.mxu0 0.0
    %2359 = vmatprep.subr.mxu0 0.0
    %2360 = vmatpush1.msra.mxu0 0.0
    %2361 = vmatprep.mubr.f32.mxu0 0.0
    %2362 = vmatmul.mubr.f32.gmra.mrb[0].mxu0 %v2295
    %v2363 = vpop.f32.mrb[0].mxu0
    %v2364 = vadd.f32 %v2284, %v2363
    %v2365 = vpop.f32.mrb[0].mxu0
    %2366 = vdwg.mxu0
    %vm2367 = vcmask 125952
    %v2368 = vsel %vm2367, %v2364, 0.0
    %v2369 = vrot.slane %v2368, 4
    %v2370 = vadd.f32 %v2368, %v2369
    %v2371 = vrot.slane %v2370, 2
    %v2372 = vadd.f32 %v2370, %v2371
    %v2373 = vrot.slane %v2372, 1
    %v2374 = vadd.f32 %v2372, %v2373
    %v2375 = vrcp.pop 4.0
    %v2376 = vmul.f32 %v2374, %v2375
    %v2377 = vld [vmem:[%s7] sm:$0xff]
    %v2378 = vld [vmem:[%s8] sm:$0xff]
    %v2379 = vld [vmem:[%s8 + $0x8] sm:$0xff]
    %vm2380 = vcmask 130048
    %v2382 = vsel %vm2380, %v2376, 0
    %2384 = vmatprep.subr.mxu0 0.0
    %2385 = vmatpush1.msra.mxu0 %v2378
    %2386 = vmatprep.subr.mxu0 0.0
    %2387 = vmatpush1.msra.mxu0 %v2379
    %2388 = vmatprep.subr.mxu0 0.0
    %2389 = vmatpush1.msra.mxu0 0.0
    %2390 = vmatprep.subr.mxu0 0.0
    %2391 = vmatpush1.msra.mxu0 0.0
    %2392 = vmatprep.subr.mxu0 0.0
    %2393 = vmatpush1.msra.mxu0 0.0
    %2394 = vmatprep.subr.mxu0 0.0
    %2395 = vmatpush1.msra.mxu0 0.0
    %2396 = vmatprep.subr.mxu0 0.0
    %2397 = vmatpush1.msra.mxu0 0.0
    %2398 = vmatprep.subr.mxu0 0.0
    %2399 = vmatpush1.msra.mxu0 0.0
    %2400 = vmatprep.subr.mxu0 0.0
    %2401 = vmatpush1.msra.mxu0 0.0
    %2402 = vmatprep.subr.mxu0 0.0
    %2403 = vmatpush1.msra.mxu0 0.0
    %2404 = vmatprep.subr.mxu0 0.0
    %2405 = vmatpush1.msra.mxu0 0.0
    %2406 = vmatprep.subr.mxu0 0.0
    %2407 = vmatpush1.msra.mxu0 0.0
    %2408 = vmatprep.subr.mxu0 0.0
    %2409 = vmatpush1.msra.mxu0 0.0
    %2410 = vmatprep.subr.mxu0 0.0
    %2411 = vmatpush1.msra.mxu0 0.0
    %2412 = vmatprep.subr.mxu0 0.0
    %2413 = vmatpush1.msra.mxu0 0.0
    %2414 = vmatprep.subr.mxu0 0.0
    %2415 = vmatpush1.msra.mxu0 0.0
    %2416 = vmatprep.subr.mxu0 0.0
    %2417 = vmatpush1.msra.mxu0 0.0
    %2418 = vmatprep.subr.mxu0 0.0
    %2419 = vmatpush1.msra.mxu0 0.0
    %2420 = vmatprep.subr.mxu0 0.0
    %2421 = vmatpush1.msra.mxu0 0.0
    %2422 = vmatprep.subr.mxu0 0.0
    %2423 = vmatpush1.msra.mxu0 0.0
    %2424 = vmatprep.subr.mxu0 0.0
    %2425 = vmatpush1.msra.mxu0 0.0
    %2426 = vmatprep.subr.mxu0 0.0
    %2427 = vmatpush1.msra.mxu0 0.0
    %2428 = vmatprep.subr.mxu0 0.0
    %2429 = vmatpush1.msra.mxu0 0.0
    %2430 = vmatprep.subr.mxu0 0.0
    %2431 = vmatpush1.msra.mxu0 0.0
    %2432 = vmatprep.subr.mxu0 0.0
    %2433 = vmatpush1.msra.mxu0 0.0
    %2434 = vmatprep.subr.mxu0 0.0
    %2435 = vmatpush1.msra.mxu0 0.0
    %2436 = vmatprep.subr.mxu0 0.0
    %2437 = vmatpush1.msra.mxu0 0.0
    %2438 = vmatprep.subr.mxu0 0.0
    %2439 = vmatpush1.msra.mxu0 0.0
    %2440 = vmatprep.subr.mxu0 0.0
    %2441 = vmatpush1.msra.mxu0 0.0
    %2442 = vmatprep.subr.mxu0 0.0
    %2443 = vmatpush1.msra.mxu0 0.0
    %2444 = vmatprep.subr.mxu0 0.0
    %2445 = vmatpush1.msra.mxu0 0.0
    %2446 = vmatprep.subr.mxu0 0.0
    %2447 = vmatpush1.msra.mxu0 0.0
    %2448 = vmatprep.mubr.f32.mxu0 0.0
    %2449 = vmatmul.mubr.f32.gmra.mrb[0].mxu0 %v2382
    %v2450 = vpop.f32.mrb[0].mxu0
    %v2451 = vadd.f32 0.0, %v2450
    %v2452 = vpop.f32.mrb[0].mxu0
    %2453 = vdwg.mxu0
    %vm2454 = vcmask 64512
    %v2456 = vsel %vm2454, %v2262, 0
    %2458 = vmatprep.subr.mxu0 0.0
    %2459 = vmatpush1.msra.mxu0 %v2377
    %2460 = vmatprep.subr.mxu0 0.0
    %2461 = vmatpush1.msra.mxu0 0.0
    %2462 = vmatprep.subr.mxu0 0.0
    %2463 = vmatpush1.msra.mxu0 0.0
    %2464 = vmatprep.subr.mxu0 0.0
    %2465 = vmatpush1.msra.mxu0 0.0
    %2466 = vmatprep.subr.mxu0 0.0
    %2467 = vmatpush1.msra.mxu0 0.0
    %2468 = vmatprep.subr.mxu0 0.0
    %2469 = vmatpush1.msra.mxu0 0.0
    %2470 = vmatprep.subr.mxu0 0.0
    %2471 = vmatpush1.msra.mxu0 0.0
    %2472 = vmatprep.subr.mxu0 0.0
    %2473 = vmatpush1.msra.mxu0 0.0
    %2474 = vmatprep.subr.mxu0 0.0
    %2475 = vmatpush1.msra.mxu0 0.0
    %2476 = vmatprep.subr.mxu0 0.0
    %2477 = vmatpush1.msra.mxu0 0.0
    %2478 = vmatprep.subr.mxu0 0.0
    %2479 = vmatpush1.msra.mxu0 0.0
    %2480 = vmatprep.subr.mxu0 0.0
    %2481 = vmatpush1.msra.mxu0 0.0
    %2482 = vmatprep.subr.mxu0 0.0
    %2483 = vmatpush1.msra.mxu0 0.0
    %2484 = vmatprep.subr.mxu0 0.0
    %2485 = vmatpush1.msra.mxu0 0.0
    %2486 = vmatprep.subr.mxu0 0.0
    %2487 = vmatpush1.msra.mxu0 0.0
    %2488 = vmatprep.subr.mxu0 0.0
    %2489 = vmatpush1.msra.mxu0 0.0
    %2490 = vmatprep.subr.mxu0 0.0
    %2491 = vmatpush1.msra.mxu0 0.0
    %2492 = vmatprep.subr.mxu0 0.0
    %2493 = vmatpush1.msra.mxu0 0.0
    %2494 = vmatprep.subr.mxu0 0.0
    %2495 = vmatpush1.msra.mxu0 0.0
    %2496 = vmatprep.subr.mxu0 0.0
    %2497 = vmatpush1.msra.mxu0 0.0
    %2498 = vmatprep.subr.mxu0 0.0
    %2499 = vmatpush1.msra.mxu0 0.0
    %2500 = vmatprep.subr.mxu0 0.0
    %2501 = vmatpush1.msra.mxu0 0.0
    %2502 = vmatprep.subr.mxu0 0.0
    %2503 = vmatpush1.msra.mxu0 0.0
    %2504 = vmatprep.subr.mxu0 0.0
    %2505 = vmatpush1.msra.mxu0 0.0
    %2506 = vmatprep.subr.mxu0 0.0
    %2507 = vmatpush1.msra.mxu0 0.0
    %2508 = vmatprep.subr.mxu0 0.0
    %2509 = vmatpush1.msra.mxu0 0.0
    %2510 = vmatprep.subr.mxu0 0.0
    %2511 = vmatpush1.msra.mxu0 0.0
    %2512 = vmatprep.subr.mxu0 0.0
    %2513 = vmatpush1.msra.mxu0 0.0
    %2514 = vmatprep.subr.mxu0 0.0
    %2515 = vmatpush1.msra.mxu0 0.0
    %2516 = vmatprep.subr.mxu0 0.0
    %2517 = vmatpush1.msra.mxu0 0.0
    %2518 = vmatprep.subr.mxu0 0.0
    %2519 = vmatpush1.msra.mxu0 0.0
    %2520 = vmatprep.subr.mxu0 0.0
    %2521 = vmatpush1.msra.mxu0 0.0
    %2522 = vmatprep.mubr.f32.mxu0 0.0
    %2523 = vmatmul.mubr.f32.gmra.mrb[0].mxu0 %v2456
    %v2524 = vpop.f32.mrb[0].mxu0
    %v2525 = vadd.f32 %v2451, %v2524
    %v2526 = vpop.f32.mrb[0].mxu0
    %2527 = vdwg.mxu0
    %v2528 = vld [vmem:[%s9] sm:$0x1]
    %v2529 = vadd.f32 %v2525, %v2528
    %v2530 = vmax.f32 %v2529, 0.0
    %v2531 = vld [vmem:[%s10] sm:$0xff]
    %v2532 = vld [vmem:[%s10 + $0x8] sm:$0xff]
    %v2533 = vld [vmem:[%s10 + $0x10] sm:$0xff]
    %v2534 = vld [vmem:[%s10 + $0x18] sm:$0xff]
    %v2535 = vld [vmem:[%s11] sm:$0x1]
    %vm2536 = vcmask 261120
    %v2538 = vsel %vm2536, %v2530, 0
    %2540 = vmatprep.subr.mxu0 0.0
    %2541 = vmatpush1.msra.mxu0 %v2531
    %2542 = vmatprep.subr.mxu0 0.0
    %2543 = vmatpush1.msra.mxu0 %v2532
    %2544 = vmatprep.subr.mxu0 0.0
    %2545 = vmatpush1.msra.mxu0 %v2533
    %2546 = vmatprep.subr.mxu0 0.0
    %2547 = vmatpush1.msra.mxu0 %v2534
    %2548 = vmatprep.subr.mxu0 0.0
    %2549 = vmatpush1.msra.mxu0 0.0
    %2550 = vmatprep.subr.mxu0 0.0
    %2551 = vmatpush1.msra.mxu0 0.0
    %2552 = vmatprep.subr.mxu0 0.0
    %2553 = vmatpush1.msra.mxu0 0.0
    %2554 = vmatprep.subr.mxu0 0.0
    %2555 = vmatpush1.msra.mxu0 0.0
    %2556 = vmatprep.subr.mxu0 0.0
    %2557 = vmatpush1.msra.mxu0 0.0
    %2558 = vmatprep.subr.mxu0 0.0
    %2559 = vmatpush1.msra.mxu0 0.0
    %2560 = vmatprep.subr.mxu0 0.0
    %2561 = vmatpush1.msra.mxu0 0.0
    %2562 = vmatprep.subr.mxu0 0.0
    %2563 = vmatpush1.msra.mxu0 0.0
    %2564 = vmatprep.subr.mxu0 0.0
    %2565 = vmatpush1.msra.mxu0 0.0
    %2566 = vmatprep.subr.mxu0 0.0
    %2567 = vmatpush1.msra.mxu0 0.0
    %2568 = vmatprep.subr.mxu0 0.0
    %2569 = vmatpush1.msra.mxu0 0.0
    %2570 = vmatprep.subr.mxu0 0.0
    %2571 = vmatpush1.msra.mxu0 0.0
    %2572 = vmatprep.subr.mxu0 0.0
    %2573 = vmatpush1.msra.mxu0 0.0
    %2574 = vmatprep.subr.mxu0 0.0
    %2575 = vmatpush1.msra.mxu0 0.0
    %2576 = vmatprep.subr.mxu0 0.0
    %2577 = vmatpush1.msra.mxu0 0.0
    %2578 = vmatprep.subr.mxu0 0.0
    %2579 = vmatpush1.msra.mxu0 0.0
    %2580 = vmatprep.subr.mxu0 0.0
    %2581 = vmatpush1.msra.mxu0 0.0
    %2582 = vmatprep.subr.mxu0 0.0
    %2583 = vmatpush1.msra.mxu0 0.0
    %2584 = vmatprep.subr.mxu0 0.0
    %2585 = vmatpush1.msra.mxu0 0.0
    %2586 = vmatprep.subr.mxu0 0.0
    %2587 = vmatpush1.msra.mxu0 0.0
    %2588 = vmatprep.subr.mxu0 0.0
    %2589 = vmatpush1.msra.mxu0 0.0
    %2590 = vmatprep.subr.mxu0 0.0
    %2591 = vmatpush1.msra.mxu0 0.0
    %2592 = vmatprep.subr.mxu0 0.0
    %2593 = vmatpush1.msra.mxu0 0.0
    %2594 = vmatprep.subr.mxu0 0.0
    %2595 = vmatpush1.msra.mxu0 0.0
    %2596 = vmatprep.subr.mxu0 0.0
    %2597 = vmatpush1.msra.mxu0 0.0
    %2598 = vmatprep.subr.mxu0 0.0
    %2599 = vmatpush1.msra.mxu0 0.0
    %2600 = vmatprep.subr.mxu0 0.0
    %2601 = vmatpush1.msra.mxu0 0.0
    %2602 = vmatprep.subr.mxu0 0.0
    %2603 = vmatpush1.msra.mxu0 0.0
    %2604 = vmatprep.mubr.f32.mxu0 0.0
    %2605 = vmatmul.mubr.f32.gmra.mrb[0].mxu0 %v2538
    %v2606 = vpop.f32.mrb[0].mxu0
    %v2607 = vadd.f32 %v2535, %v2606
    %v2608 = vpop.f32.mrb[0].mxu0
    %2609 = vdwg.mxu0
    %v2610 = vmax.f32 %v2607, 0.0
    %v2611 = vpack.c.bf16 %v2610, %v2610
    %v2612 = vld [vmem:[%s12] sm:$0xff]
    %v2613 = vld [vmem:[%s12 + $0x8] sm:$0xff]
    %v2614 = vld [vmem:[%s12 + $0x10] sm:$0xf]
    %v2615 = vld [vmem:[%s12 + $0x14] sm:$0xff]
    %v2616 = vld [vmem:[%s12 + $0x1c] sm:$0xff]
    %v2617 = vld [vmem:[%s12 + $0x24] sm:$0xf]
    %v2618 = vld [vmem:[%s12 + $0x28] sm:$0xff]
    %v2619 = vld [vmem:[%s12 + $0x30] sm:$0xff]
    %v2620 = vld [vmem:[%s12 + $0x38] sm:$0xf]
    %v2621 = vld [vmem:[%s12 + $0x3c] sm:$0xff]
    %v2622 = vld [vmem:[%s12 + $0x44] sm:$0xff]
    %v2623 = vld [vmem:[%s12 + $0x4c] sm:$0xf]
    %v2624 = vld [vmem:[%s13] sm:$0x1f]
    %v2637 = vunpack.c.l.b16 %v2612
    %v2638 = vunpack.c.h.b16 %v2612
    %v2639 = vunpack.c.l.b16 %v2613
    %v2640 = vunpack.c.h.b16 %v2613
    %v2641 = vunpack.c.l.b16 %v2614
    %v2642 = vunpack.c.l.b16 %v2615
    %v2643 = vunpack.c.h.b16 %v2615
    %v2644 = vunpack.c.l.b16 %v2616
    %v2645 = vunpack.c.h.b16 %v2616
    %v2646 = vunpack.c.l.b16 %v2617
    %v2647 = vunpack.c.l.b16 %v2618
    %v2648 = vunpack.c.h.b16 %v2618
    %v2649 = vunpack.c.l.b16 %v2619
    %v2650 = vunpack.c.h.b16 %v2619
    %v2651 = vunpack.c.l.b16 %v2620
    %v2652 = vunpack.c.l.b16 %v2621
    %v2653 = vunpack.c.h.b16 %v2621
    %v2654 = vunpack.c.l.b16 %v2622
    %v2655 = vunpack.c.h.b16 %v2622
    %v2656 = vunpack.c.l.b16 %v2623
    %v2657 = vpack.c.b16 %v2642, %v2637
    %v2658 = vpack.c.b16 %v2643, %v2638
    %v2659 = vpack.c.b16 %v2644, %v2639
    %v2660 = vpack.c.b16 %v2645, %v2640
    %v2661 = vpack.c.b16 %v2646, %v2641
    %v2662 = vpack.c.b16 %v2652, %v2647
    %v2663 = vpack.c.b16 %v2653, %v2648
    %v2664 = vpack.c.b16 %v2654, %v2649
    %v2665 = vpack.c.b16 %v2655, %v2650
    %v2666 = vpack.c.b16 %v2656, %v2651
    %v2678 = vlaneseq
    %v2679 = vshrl.u32 %v2678, 7
    %v2680 = vsub.s32 0, %v2679
    %v2681 = vrot.slane %v2624, %v2680
    %v2682 = vlaneseq
    %v2683 = vshrl.u32 %v2682, 7
    %v2684 = vsub.s32 1, %v2683
    %v2685 = vrot.slane %v2624, %v2684
    %v2686 = vlaneseq
    %v2687 = vshrl.u32 %v2686, 7
    %v2688 = vsub.s32 2, %v2687
    %v2689 = vrot.slane %v2624, %v2688
    %v2690 = vlaneseq
    %v2691 = vshrl.u32 %v2690, 7
    %v2692 = vsub.s32 3, %v2691
    %v2693 = vrot.slane %v2624, %v2692
    %v2694 = vlaneseq
    %v2695 = vshrl.u32 %v2694, 7
    %v2696 = vsub.s32 4, %v2695
    %v2697 = vrot.slane %v2624, %v2696
    %v2704 = vsel %vm2536, %v2611, 0
    %2706 = vmatprep.subr.bf16.mxu0 %v2658
    %2707 = vmatpush1.bf16.msra.mxu0 %v2657
    %2708 = vmatprep.subr.bf16.mxu0 %v2663
    %2709 = vmatpush1.bf16.msra.mxu0 %v2662
    %2710 = vmatprep.subr.bf16.mxu0 0
    %2711 = vmatpush1.bf16.msra.mxu0 0
    %2712 = vmatprep.subr.bf16.mxu0 0
    %2713 = vmatpush1.bf16.msra.mxu0 0
    %2714 = vmatprep.subr.bf16.mxu0 0
    %2715 = vmatpush1.bf16.msra.mxu0 0
    %2716 = vmatprep.subr.bf16.mxu0 0
    %2717 = vmatpush1.bf16.msra.mxu0 0
    %2718 = vmatprep.subr.bf16.mxu0 0
    %2719 = vmatpush1.bf16.msra.mxu0 0
    %2720 = vmatprep.subr.bf16.mxu0 0
    %2721 = vmatpush1.bf16.msra.mxu0 0
    %2722 = vmatprep.subr.bf16.mxu0 0
    %2723 = vmatpush1.bf16.msra.mxu0 0
    %2724 = vmatprep.subr.bf16.mxu0 0
    %2725 = vmatpush1.bf16.msra.mxu0 0
    %2726 = vmatprep.subr.bf16.mxu0 0
    %2727 = vmatpush1.bf16.msra.mxu0 0
    %2728 = vmatprep.subr.bf16.mxu0 0
    %2729 = vmatpush1.bf16.msra.mxu0 0
    %2730 = vmatprep.subr.bf16.mxu0 0
    %2731 = vmatpush1.bf16.msra.mxu0 0
    %2732 = vmatprep.subr.bf16.mxu0 0
    %2733 = vmatpush1.bf16.msra.mxu0 0
    %2734 = vmatprep.subr.bf16.mxu0 0
    %2735 = vmatpush1.bf16.msra.mxu0 0
    %2736 = vmatprep.subr.bf16.mxu0 0
    %2737 = vmatpush1.bf16.msra.mxu0 0
    %2738 = vmatprep.mubr.bf16.mxu0 0
    %2739 = vmatmul.mubr.bf16.gmra.mrb[0].mxu0 %v2704
    %v2740 = vpop.f32.mrb[0].mxu0
    %v2741 = vadd.f32 %v2681, %v2740
    %v2742 = vpop.f32.mrb[0].mxu0
    %v2743 = vadd.f32 %v2685, %v2742
    %v2744 = vpop.f32.mrb[0].mxu0
    %v2745 = vpop.f32.mrb[0].mxu0
    %2746 = vdwg.mxu0
    %2747 = vmatprep.subr.bf16.mxu0 %v2660
    %2748 = vmatpush1.bf16.msra.mxu0 %v2659
    %2749 = vmatprep.subr.bf16.mxu0 %v2665
    %2750 = vmatpush1.bf16.msra.mxu0 %v2664
    %2751 = vmatprep.subr.bf16.mxu0 0
    %2752 = vmatpush1.bf16.msra.mxu0 0
    %2753 = vmatprep.subr.bf16.mxu0 0
    %2754 = vmatpush1.bf16.msra.mxu0 0
    %2755 = vmatprep.subr.bf16.mxu0 0
    %2756 = vmatpush1.bf16.msra.mxu0 0
    %2757 = vmatprep.subr.bf16.mxu0 0
    %2758 = vmatpush1.bf16.msra.mxu0 0
    %2759 = vmatprep.subr.bf16.mxu0 0
    %2760 = vmatpush1.bf16.msra.mxu0 0
    %2761 = vmatprep.subr.bf16.mxu0 0
    %2762 = vmatpush1.bf16.msra.mxu0 0
    %2763 = vmatprep.subr.bf16.mxu0 0
    %2764 = vmatpush1.bf16.msra.mxu0 0
    %2765 = vmatprep.subr.bf16.mxu0 0
    %2766 = vmatpush1.bf16.msra.mxu0 0
    %2767 = vmatprep.subr.bf16.mxu0 0
    %2768 = vmatpush1.bf16.msra.mxu0 0
    %2769 = vmatprep.subr.bf16.mxu0 0
    %2770 = vmatpush1.bf16.msra.mxu0 0
    %2771 = vmatprep.subr.bf16.mxu0 0
    %2772 = vmatpush1.bf16.msra.mxu0 0
    %2773 = vmatprep.subr.bf16.mxu0 0
    %2774 = vmatpush1.bf16.msra.mxu0 0
    %2775 = vmatprep.subr.bf16.mxu0 0
    %2776 = vmatpush1.bf16.msra.mxu0 0
    %2777 = vmatprep.subr.bf16.mxu0 0
    %2778 = vmatpush1.bf16.msra.mxu0 0
    %2779 = vmatprep.mubr.bf16.mxu0 0
    %2780 = vmatmul.mubr.bf16.gmra.mrb[0].mxu0 %v2704
    %v2781 = vpop.f32.mrb[0].mxu0
    %v2782 = vadd.f32 %v2689, %v2781
    %v2783 = vpop.f32.mrb[0].mxu0
    %v2784 = vadd.f32 %v2693, %v2783
    %v2785 = vpop.f32.mrb[0].mxu0
    %v2786 = vpop.f32.mrb[0].mxu0
    %2787 = vdwg.mxu0
    %2788 = vmatprep.subr.bf16.mxu0 0
    %2789 = vmatpush1.bf16.msra.mxu0 %v2661
    %2790 = vmatprep.subr.bf16.mxu0 0
    %2791 = vmatpush1.bf16.msra.mxu0 %v2666
    %2792 = vmatprep.subr.bf16.mxu0 0
    %2793 = vmatpush1.bf16.msra.mxu0 0
    %2794 = vmatprep.subr.bf16.mxu0 0
    %2795 = vmatpush1.bf16.msra.mxu0 0
    %2796 = vmatprep.subr.bf16.mxu0 0
    %2797 = vmatpush1.bf16.msra.mxu0 0
    %2798 = vmatprep.subr.bf16.mxu0 0
    %2799 = vmatpush1.bf16.msra.mxu0 0
    %2800 = vmatprep.subr.bf16.mxu0 0
    %2801 = vmatpush1.bf16.msra.mxu0 0
    %2802 = vmatprep.subr.bf16.mxu0 0
    %2803 = vmatpush1.bf16.msra.mxu0 0
    %2804 = vmatprep.subr.bf16.mxu0 0
    %2805 = vmatpush1.bf16.msra.mxu0 0
    %2806 = vmatprep.subr.bf16.mxu0 0
    %2807 = vmatpush1.bf16.msra.mxu0 0
    %2808 = vmatprep.subr.bf16.mxu0 0
    %2809 = vmatpush1.bf16.msra.mxu0 0
    %2810 = vmatprep.subr.bf16.mxu0 0
    %2811 = vmatpush1.bf16.msra.mxu0 0
    %2812 = vmatprep.subr.bf16.mxu0 0
    %2813 = vmatpush1.bf16.msra.mxu0 0
    %2814 = vmatprep.subr.bf16.mxu0 0
    %2815 = vmatpush1.bf16.msra.mxu0 0
    %2816 = vmatprep.subr.bf16.mxu0 0
    %2817 = vmatpush1.bf16.msra.mxu0 0
    %2818 = vmatprep.subr.bf16.mxu0 0
    %2819 = vmatpush1.bf16.msra.mxu0 0
    %2820 = vmatprep.mubr.bf16.mxu0 0
    %2821 = vmatmul.mubr.bf16.gmra.mrb[0].mxu0 %v2704
    %v2822 = vpop.f32.mrb[0].mxu0
    %v2823 = vadd.f32 %v2697, %v2822
    %v2824 = vpop.f32.mrb[0].mxu0
    %v2825 = vpop.f32.mrb[0].mxu0
    %v2826 = vpop.f32.mrb[0].mxu0
    %2827 = vdwg.mxu0
    %v2833 = vcombine.low %v2741, %v2743
    %v2834 = vcombine.low %v2782, %v2784
    %v2836 = vunpack.c.l.s4 1966171168
    %v2837 = vunpack.c.0.s8 %v2836
    %v2838 = vlaneseq
    %v2839 = vshrl.u32 %v2838, 7
    %v2840 = vsub.s32 %v2837, %v2839
    %v2841 = vrot.slane %v2833, %v2840
    %v2843 = vunpack.c.l.s4 1966171168
    %v2844 = vunpack.c.0.s8 %v2843
    %v2845 = vlaneseq
    %v2846 = vshrl.u32 %v2845, 7
    %v2847 = vsub.s32 %v2844, %v2846
    %v2848 = vrot.slane %v2834, %v2847
    %v2850 = vunpack.c.l.s4 1966171168
    %v2851 = vunpack.c.0.s8 %v2850
    %v2852 = vlaneseq
    %v2853 = vshrl.u32 %v2852, 7
    %v2854 = vsub.s32 %v2851, %v2853
    %v2855 = vrot.slane %v2823, %v2854
    %v2856 = vcombine.low %v2841, %v2848
    %v2858 = vunpack.c.l.s4 1966171168
    %v2859 = vunpack.c.0.s8 %v2858
    %v2860 = vlaneseq
    %v2861 = vshrl.u32 %v2860, 7
    %v2862 = vsub.s32 %v2859, %v2861
    %v2863 = vrot.slane %v2856, %v2862
    %v2865 = vunpack.c.l.s4 1966171168
    %v2866 = vunpack.c.0.s8 %v2865
    %v2867 = vlaneseq
    %v2868 = vshrl.u32 %v2867, 7
    %v2869 = vsub.s32 %v2866, %v2868
    %v2870 = vrot.slane %v2855, %v2869
    %v2871 = vcombine.low %v2863, %v2870
    %v2875 = vsel %vm2290, %v2255, %v2254
    %2877 = vmatprep.subr.mxu0 0.0
    %2878 = vmatpush1.xpose.msra.mxu0 %v2871
    %2879 = vmatprep.subr.mxu0 0.0
    %2880 = vmatpush1.xpose.msra.mxu0 0.0
    %2881 = vmatprep.subr.mxu0 0.0
    %2882 = vmatpush1.xpose.msra.mxu0 0.0
    %2883 = vmatprep.subr.mxu0 0.0
    %2884 = vmatpush1.xpose.msra.mxu0 0.0
    %2885 = vmatprep.subr.mxu0 0.0
    %2886 = vmatpush1.xpose.msra.mxu0 0.0
    %2887 = vmatprep.subr.mxu0 0.0
    %2888 = vmatpush1.xpose.msra.mxu0 0.0
    %2889 = vmatprep.subr.mxu0 0.0
    %2890 = vmatpush1.xpose.msra.mxu0 0.0
    %2891 = vmatprep.subr.mxu0 0.0
    %2892 = vmatpush1.xpose.msra.mxu0 0.0
    %2893 = vmatprep.subr.mxu0 0.0
    %2894 = vmatpush1.xpose.msra.mxu0 0.0
    %2895 = vmatprep.subr.mxu0 0.0
    %2896 = vmatpush1.xpose.msra.mxu0 0.0
    %2897 = vmatprep.subr.mxu0 0.0
    %2898 = vmatpush1.xpose.msra.mxu0 0.0
    %2899 = vmatprep.subr.mxu0 0.0
    %2900 = vmatpush1.xpose.msra.mxu0 0.0
    %2901 = vmatprep.subr.mxu0 0.0
    %2902 = vmatpush1.xpose.msra.mxu0 0.0
    %2903 = vmatprep.subr.mxu0 0.0
    %2904 = vmatpush1.xpose.msra.mxu0 0.0
    %2905 = vmatprep.subr.mxu0 0.0
    %2906 = vmatpush1.xpose.msra.mxu0 0.0
    %2907 = vmatprep.subr.mxu0 0.0
    %2908 = vmatpush1.xpose.msra.mxu0 0.0
    %2909 = vmatprep.subr.mxu0 0.0
    %2910 = vmatpush1.xpose.msra.mxu0 0.0
    %2911 = vmatprep.subr.mxu0 0.0
    %2912 = vmatpush1.xpose.msra.mxu0 0.0
    %2913 = vmatprep.subr.mxu0 0.0
    %2914 = vmatpush1.xpose.msra.mxu0 0.0
    %2915 = vmatprep.subr.mxu0 0.0
    %2916 = vmatpush1.xpose.msra.mxu0 0.0
    %2917 = vmatprep.subr.mxu0 0.0
    %2918 = vmatpush1.xpose.msra.mxu0 0.0
    %2919 = vmatprep.subr.mxu0 0.0
    %2920 = vmatpush1.xpose.msra.mxu0 0.0
    %2921 = vmatprep.subr.mxu0 0.0
    %2922 = vmatpush1.xpose.msra.mxu0 0.0
    %2923 = vmatprep.subr.mxu0 0.0
    %2924 = vmatpush1.xpose.msra.mxu0 0.0
    %2925 = vmatprep.subr.mxu0 0.0
    %2926 = vmatpush1.xpose.msra.mxu0 0.0
    %2927 = vmatprep.subr.mxu0 0.0
    %2928 = vmatpush1.xpose.msra.mxu0 0.0
    %2929 = vmatprep.subr.mxu0 0.0
    %2930 = vmatpush1.xpose.msra.mxu0 0.0
    %2931 = vmatprep.subr.mxu0 0.0
    %2932 = vmatpush1.xpose.msra.mxu0 0.0
    %2933 = vmatprep.subr.mxu0 0.0
    %2934 = vmatpush1.xpose.msra.mxu0 0.0
    %2935 = vmatprep.subr.mxu0 0.0
    %2936 = vmatpush1.xpose.msra.mxu0 0.0
    %2937 = vmatprep.subr.mxu0 0.0
    %2938 = vmatpush1.xpose.msra.mxu0 0.0
    %2939 = vmatprep.subr.mxu0 0.0
    %2940 = vmatpush1.xpose.msra.mxu0 0.0
    %2941 = vmatprep.mubr.f32.mxu0 0.0
    %2942 = vmatmul.mubr.f32.gmra.mrb[0].mxu0 %v2875
    %v2943 = vpop.f32.mrb[0].mxu0
    %v2944 = vadd.f32 0.0, %v2943
    %v2945 = vpop.f32.mrb[0].mxu0
    %2946 = vdwg.mxu0
    %vm2947 = vcmask 33792
    %2948 = vst.msk [vmem:[#allocation4] sm:$0x3] %vm2947, %v2944
    // Predicated region
    $region54: #{hypercmtl_forward.1} parent=1 // pred_check
      _
    $region55: #{hypercmtl_forward.1} parent=1 // pred_check_branch
      %2950 = sbr.rel (0) target = $region57
    $region56: #{hypercmtl_forward.1} parent=1 // pred_region
      %s2952 = ssub.s32 32, 32
      %2953 = vsyncadd [#allocation5], %s2952
      %s2955 = sshll.u32 [#allocation4], 4
      %s2956 = int_to_ptr.vmem [resolvable:$true] %s2955
      %2958 = dma.vmem_to_hbm [thread:$0]  %s2956, 32, %s14, [#allocation5]
    $region57: #{hypercmtl_forward.1} parent=1 // pred_fallthru
      _
    // Predicated region
    $region58: #{hypercmtl_forward.1} parent=1 // pred_check
      _
    $region59: #{hypercmtl_forward.1} parent=1 // pred_check_branch
      %2960 = sbr.rel (0) target = $region61
    $region60: #{hypercmtl_forward.1} parent=1 // pred_region
      %2961 = dma.done [#allocation5], 32
    $region61: #{hypercmtl_forward.1} parent=1 // pred_fallthru
      _
    %2962 = vsyncpa [#allocation5], 1

</llo_original>
